<compile_context>
chip_gen: v7x
topology: tpu7x:2x2x1
jax: 0.10.0
libtpu: 0.0.40
codegen_flags: <defaults>
</compile_context>

<pallas_src>
import math
import functools

import jax
import jax.numpy as jnp
from jax.experimental import pallas as pl


# ----------------------------------------------------------------------------
# Fused MHA kernel: one invocation handles all batches and heads.
# ----------------------------------------------------------------------------
def _mha_kernel(x_ref, bias_ref, wqkv_ref, bqkv_ref, wf_ref, bf_ref, o_ref,
                *, batch, seq, d_model, heads, d_subspace):
    B, S, D, H, Dh = batch, seq, d_model, heads, d_subspace
    BS = B * S
    c_dt = wqkv_ref.dtype                     # MXU operand dtype (bf16 or f32)

    def dot(a, b):                            # a (m,k) @ b (k,n) -> f32 (m,n)
        return jnp.dot(a.astype(c_dt), b.astype(c_dt),
                       preferred_element_type=jnp.float32)

    def dot_nt(a, b):                         # a (m,k), b (n,k) -> f32 (m,n)
        return jax.lax.dot_general(
            a.astype(c_dt), b.astype(c_dt),
            dimension_numbers=(((1,), (1,)), ((), ())),
            preferred_element_type=jnp.float32)

    # --- fused Q/K/V projection: one MXU push on a (3*B*S, D) row slab -------
    x = x_ref[...]                                            # (3*BS, D) bf16
    y = dot(x, wqkv_ref[...]) + bqkv_ref[...]                 # (3*BS, 3D) f32
    qp = y[0:BS,        0:D]                                  # (BS, D) scaled Q
    kp = y[BS:2 * BS,   D:2 * D]
    vp = y[2 * BS:3 * BS, 2 * D:3 * D]
    q16 = qp.astype(c_dt)
    k16 = kp.astype(c_dt)
    v16 = vp.astype(c_dt)

    # --- scores for every (batch, head) pair, stacked along sublanes ---------
    blocks = []
    for b in range(B):
        for h in range(H):
            qh = q16[b * S:(b + 1) * S, h * Dh:(h + 1) * Dh]  # (S, Dh)
            kh = k16[b * S:(b + 1) * S, h * Dh:(h + 1) * Dh]  # (S, Dh)
            blocks.append(dot_nt(qh, kh))                     # (S, S)
    s = jnp.concatenate(blocks, axis=0) + bias_ref[...]       # (B*H*S, S) f32

    # --- single batched masked softmax over all (b, h) rows ------------------
    s = s - jnp.max(s, axis=-1, keepdims=True)
    p = jnp.exp(s)
    p = p * pl.reciprocal(jnp.sum(p, axis=-1, keepdims=True), approx=True)
    p16 = p.astype(c_dt)

    # --- per-head PV + accumulation into the fusion output (no lane concat) --
    wf = wf_ref[...]                                          # (D, D)
    rows = []
    for b in range(B):
        acc = None
        for h in range(H):
            p_bh = p16[(b * H + h) * S:(b * H + h + 1) * S, :]        # (S, S)
            v_bh = v16[b * S:(b + 1) * S, h * Dh:(h + 1) * Dh]        # (S, Dh)
            ctx = dot(p_bh, v_bh)                                     # (S, Dh)
            contrib = dot(ctx, wf[h * Dh:(h + 1) * Dh, :])            # (S, D)
            acc = contrib if acc is None else acc + contrib
        rows.append(acc + bf_ref[...])
    out = jnp.concatenate(rows, axis=0)                               # (B*S, D)
    o_ref[...] = out.astype(o_ref.dtype)


def multi_head_attention(params, q, k, v, mask, heads,
                         *, matmul_dtype=jnp.bfloat16):
    """q, k, v: (B, S, D); mask: (B, Sq, Sk) bool. Returns (B, S, D)."""
    B, S, D = q.shape
    Dh = D // heads
    scale = jnp.float32(1.0 / math.sqrt(Dh))

    # Pre-transpose weights to (Din, Dout); fold the attention scale into WQ;
    # concatenate Q/K/V weights along the output-lane axis for one fused push.
    wq_t = params["WQ_w"].T * scale
    wk_t = params["WK_w"].T
    wv_t = params["WV_w"].T
    w_qkv = jnp.concatenate([wq_t, wk_t, wv_t], axis=1).astype(matmul_dtype)  # (D, 3D)
    b_qkv = jnp.concatenate([params["WQ_b"] * scale,
                             params["WK_b"],
                             params["WV_b"]]).reshape(1, 3 * D).astype(jnp.float32)
    wf_t = params["fusion_w"].T.astype(matmul_dtype)                          # (D, D)
    bf = params["fusion_b"].reshape(1, D).astype(jnp.float32)

    # Row-stack the three inputs so the fused projection is one matmul.
    x_cat = jnp.concatenate(
        [q.reshape(B * S, D), k.reshape(B * S, D), v.reshape(B * S, D)],
        axis=0).astype(matmul_dtype)                                          # (3*B*S, D)

    # Additive mask bias, precomputed once and pre-tiled over heads so the
    # kernel only adds.  Row layout matches the in-kernel (b, h, q) stacking.
    neg_bias = jnp.where(mask, 0.0, -1e9).astype(jnp.float32)                 # (B, S, S)
    neg_bias = jnp.tile(neg_bias, (1, heads, 1)).reshape(B * heads * S, S)    # (B*H*S, S)

    kernel = functools.partial(_mha_kernel, batch=B, seq=S, d_model=D,
                               heads=heads, d_subspace=Dh)

    # Advisory cost so XLA schedules surrounding ops around this tiny call.
    flops = (2 * (3 * B * S) * D * (3 * D)                       # fused projection
             + B * heads * (2 * S * S * Dh                       # Q.K^T
                            + 2 * S * S * Dh                     # P.V
                            + 2 * S * Dh * D))                   # per-head fusion
    bytes_accessed = sum(int(a.size) * a.dtype.itemsize
                         for a in (x_cat, neg_bias, w_qkv, b_qkv, wf_t, bf))
    bytes_accessed += B * S * D * q.dtype.itemsize               # output
    cost = pl.CostEstimate(flops=flops,
                           transcendentals=B * heads * S * S,
                           bytes_accessed=bytes_accessed)

    out = pl.pallas_call(
        kernel,
        out_shape=jax.ShapeDtypeStruct((B * S, D), q.dtype),
        cost_estimate=cost,
    )(x_cat, neg_bias, w_qkv, b_qkv, wf_t, bf)
    return out.reshape(B, S, D)


# ----------------------------------------------------------------------------
# Pure-JAX reference (mirrors the PyTorch forward) for a silent sanity check
# ----------------------------------------------------------------------------
def reference_mha(params, q, k, v, mask, heads):
    B, S, D = q.shape
    Dh = D // heads

    def lin(x, w, b):
        return x @ w.T + b

    def proj(x, w, b):
        return lin(x, w, b).reshape(B, S, heads, Dh).transpose(0, 2, 1, 3)

    qh = proj(q, params["WQ_w"], params["WQ_b"])
    kh = proj(k, params["WK_w"], params["WK_b"])
    vh = proj(v, params["WV_w"], params["WV_b"])
    scores = jnp.einsum("bhqd,bhkd->bhqk", qh, kh) / math.sqrt(Dh)
    scores = jnp.where(mask[:, None, :, :], scores, -1e9)
    scores = jax.nn.softmax(scores, axis=-1)
    out = jnp.einsum("bhqk,bhkd->bhqd", scores, vh)
    concat = out.transpose(0, 2, 1, 3).reshape(B, S, D)
    return lin(concat, params["fusion_w"], params["fusion_b"])


if __name__ == "__main__":
    heads, d_model = 4, 32
    B, S = 2, 8

    key = jax.random.PRNGKey(0)
    ks = jax.random.split(key, 12)

    def init_linear(kw, kb, d_out, d_in):
        bound = 1.0 / math.sqrt(d_in)
        w = jax.random.uniform(kw, (d_out, d_in), jnp.float32, -bound, bound)
        b = jax.random.uniform(kb, (d_out,), jnp.float32, -bound, bound)
        return w, b

    params = {}
    params["WQ_w"], params["WQ_b"] = init_linear(ks[0], ks[1], d_model, d_model)
    params["WK_w"], params["WK_b"] = init_linear(ks[2], ks[3], d_model, d_model)
    params["WV_w"], params["WV_b"] = init_linear(ks[4], ks[5], d_model, d_model)
    params["fusion_w"], params["fusion_b"] = init_linear(ks[6], ks[7], d_model, d_model)

    q = jax.random.normal(ks[8], (B, S, d_model), jnp.float32)
    k = jax.random.normal(ks[9], (B, S, d_model), jnp.float32)
    v = jax.random.normal(ks[10], (B, S, d_model), jnp.float32)
    mask = jax.random.bernoulli(ks[11], p=0.8, shape=(B, S, S))
    mask = jnp.logical_or(mask, jnp.eye(S, dtype=bool)[None])  # no fully-masked rows

    out = multi_head_attention(params, q, k, v, mask, heads)
    out = jax.block_until_ready(out)

    ref = reference_mha(params, q, k, v, mask, heads)
    assert out.shape == (B, S, d_model)
    # Tolerance reflects bf16 MXU operands + the approximate (EUP) reciprocal in
    # the softmax normalization; structural errors would be orders larger.
    assert jnp.allclose(out, ref, atol=3e-2, rtol=3e-2), (
        float(jnp.max(jnp.abs(out - ref))))

    print("KERNEL_OK")
</pallas_src>

<mosaic_0001>
module attributes {stable_mosaic.version = 11 : i64} {
  func.func @_mha_kernel(%arg0: memref<48x32xbf16, #tpu.memory_space<vmem>>, %arg1: memref<64x8xf32, #tpu.memory_space<vmem>>, %arg2: memref<32x96xbf16, #tpu.memory_space<vmem>>, %arg3: memref<1x96xf32, #tpu.memory_space<vmem>>, %arg4: memref<32x32xbf16, #tpu.memory_space<vmem>>, %arg5: memref<1x32xf32, #tpu.memory_space<vmem>>, %arg6: memref<16x32xf32, #tpu.memory_space<vmem>>) attributes {dimension_semantics = [], scalar_prefetch = 0 : i64, scratch_operands = 0 : i64, tpu.core_type = #tpu.core_type<tc>} {
    %c0 = arith.constant 0 : index
    %c0_0 = arith.constant 0 : index
    %0 = vector.load %arg0[%c0, %c0_0] : memref<48x32xbf16, #tpu.memory_space<vmem>>, vector<48x32xbf16>
    %c0_1 = arith.constant 0 : index
    %c0_2 = arith.constant 0 : index
    %1 = vector.load %arg2[%c0_1, %c0_2] : memref<32x96xbf16, #tpu.memory_space<vmem>>, vector<32x96xbf16>
    %cst = arith.constant dense<0.000000e+00> : vector<48x96xf32>
    %2 = tpu.matmul %0, %1, %cst {dimension_numbers = #tpu.dot_dimension_numbers<[1], [0], [0], [1], [0, 0, 1, 1], [], []>} : vector<48x32xbf16>, vector<32x96xbf16>, vector<48x96xf32> -> vector<48x96xf32>
    %c0_3 = arith.constant 0 : index
    %c0_4 = arith.constant 0 : index
    %3 = vector.load %arg3[%c0_3, %c0_4] : memref<1x96xf32, #tpu.memory_space<vmem>>, vector<1x96xf32>
    %4 = vector.broadcast %3 : vector<1x96xf32> to vector<48x96xf32>
    %5 = arith.addf %2, %4 : vector<48x96xf32>
    %6 = vector.extract_strided_slice %5 {offsets = [0, 0], sizes = [16, 32], strides = [1, 1]} : vector<48x96xf32> to vector<16x32xf32>
    %7 = vector.extract_strided_slice %5 {offsets = [16, 32], sizes = [16, 32], strides = [1, 1]} : vector<48x96xf32> to vector<16x32xf32>
    %8 = vector.extract_strided_slice %5 {offsets = [32, 64], sizes = [16, 32], strides = [1, 1]} : vector<48x96xf32> to vector<16x32xf32>
    %9 = arith.truncf %6 : vector<16x32xf32> to vector<16x32xbf16>
    %10 = arith.truncf %7 : vector<16x32xf32> to vector<16x32xbf16>
    %11 = arith.truncf %8 : vector<16x32xf32> to vector<16x32xbf16>
    %12 = vector.extract_strided_slice %9 {offsets = [0, 0], sizes = [8, 8], strides = [1, 1]} : vector<16x32xbf16> to vector<8x8xbf16>
    %13 = vector.extract_strided_slice %10 {offsets = [0, 0], sizes = [8, 8], strides = [1, 1]} : vector<16x32xbf16> to vector<8x8xbf16>
    %cst_5 = arith.constant dense<0.000000e+00> : vector<8x8xf32>
    %14 = tpu.matmul %12, %13, %cst_5 {dimension_numbers = #tpu.dot_dimension_numbers<[1], [1], [0], [0], [0, 0, 1, 0], [], []>} : vector<8x8xbf16>, vector<8x8xbf16>, vector<8x8xf32> -> vector<8x8xf32>
    %15 = vector.extract_strided_slice %9 {offsets = [0, 8], sizes = [8, 8], strides = [1, 1]} : vector<16x32xbf16> to vector<8x8xbf16>
    %16 = vector.extract_strided_slice %10 {offsets = [0, 8], sizes = [8, 8], strides = [1, 1]} : vector<16x32xbf16> to vector<8x8xbf16>
    %cst_6 = arith.constant dense<0.000000e+00> : vector<8x8xf32>
    %17 = tpu.matmul %15, %16, %cst_6 {dimension_numbers = #tpu.dot_dimension_numbers<[1], [1], [0], [0], [0, 0, 1, 0], [], []>} : vector<8x8xbf16>, vector<8x8xbf16>, vector<8x8xf32> -> vector<8x8xf32>
    %18 = vector.extract_strided_slice %9 {offsets = [0, 16], sizes = [8, 8], strides = [1, 1]} : vector<16x32xbf16> to vector<8x8xbf16>
    %19 = vector.extract_strided_slice %10 {offsets = [0, 16], sizes = [8, 8], strides = [1, 1]} : vector<16x32xbf16> to vector<8x8xbf16>
    %cst_7 = arith.constant dense<0.000000e+00> : vector<8x8xf32>
    %20 = tpu.matmul %18, %19, %cst_7 {dimension_numbers = #tpu.dot_dimension_numbers<[1], [1], [0], [0], [0, 0, 1, 0], [], []>} : vector<8x8xbf16>, vector<8x8xbf16>, vector<8x8xf32> -> vector<8x8xf32>
    %21 = vector.extract_strided_slice %9 {offsets = [0, 24], sizes = [8, 8], strides = [1, 1]} : vector<16x32xbf16> to vector<8x8xbf16>
    %22 = vector.extract_strided_slice %10 {offsets = [0, 24], sizes = [8, 8], strides = [1, 1]} : vector<16x32xbf16> to vector<8x8xbf16>
    %cst_8 = arith.constant dense<0.000000e+00> : vector<8x8xf32>
    %23 = tpu.matmul %21, %22, %cst_8 {dimension_numbers = #tpu.dot_dimension_numbers<[1], [1], [0], [0], [0, 0, 1, 0], [], []>} : vector<8x8xbf16>, vector<8x8xbf16>, vector<8x8xf32> -> vector<8x8xf32>
    %24 = vector.extract_strided_slice %9 {offsets = [8, 0], sizes = [8, 8], strides = [1, 1]} : vector<16x32xbf16> to vector<8x8xbf16>
    %25 = vector.extract_strided_slice %10 {offsets = [8, 0], sizes = [8, 8], strides = [1, 1]} : vector<16x32xbf16> to vector<8x8xbf16>
    %cst_9 = arith.constant dense<0.000000e+00> : vector<8x8xf32>
    %26 = tpu.matmul %24, %25, %cst_9 {dimension_numbers = #tpu.dot_dimension_numbers<[1], [1], [0], [0], [0, 0, 1, 0], [], []>} : vector<8x8xbf16>, vector<8x8xbf16>, vector<8x8xf32> -> vector<8x8xf32>
    %27 = vector.extract_strided_slice %9 {offsets = [8, 8], sizes = [8, 8], strides = [1, 1]} : vector<16x32xbf16> to vector<8x8xbf16>
    %28 = vector.extract_strided_slice %10 {offsets = [8, 8], sizes = [8, 8], strides = [1, 1]} : vector<16x32xbf16> to vector<8x8xbf16>
    %cst_10 = arith.constant dense<0.000000e+00> : vector<8x8xf32>
    %29 = tpu.matmul %27, %28, %cst_10 {dimension_numbers = #tpu.dot_dimension_numbers<[1], [1], [0], [0], [0, 0, 1, 0], [], []>} : vector<8x8xbf16>, vector<8x8xbf16>, vector<8x8xf32> -> vector<8x8xf32>
    %30 = vector.extract_strided_slice %9 {offsets = [8, 16], sizes = [8, 8], strides = [1, 1]} : vector<16x32xbf16> to vector<8x8xbf16>
    %31 = vector.extract_strided_slice %10 {offsets = [8, 16], sizes = [8, 8], strides = [1, 1]} : vector<16x32xbf16> to vector<8x8xbf16>
    %cst_11 = arith.constant dense<0.000000e+00> : vector<8x8xf32>
    %32 = tpu.matmul %30, %31, %cst_11 {dimension_numbers = #tpu.dot_dimension_numbers<[1], [1], [0], [0], [0, 0, 1, 0], [], []>} : vector<8x8xbf16>, vector<8x8xbf16>, vector<8x8xf32> -> vector<8x8xf32>
    %33 = vector.extract_strided_slice %9 {offsets = [8, 24], sizes = [8, 8], strides = [1, 1]} : vector<16x32xbf16> to vector<8x8xbf16>
    %34 = vector.extract_strided_slice %10 {offsets = [8, 24], sizes = [8, 8], strides = [1, 1]} : vector<16x32xbf16> to vector<8x8xbf16>
    %cst_12 = arith.constant dense<0.000000e+00> : vector<8x8xf32>
    %35 = tpu.matmul %33, %34, %cst_12 {dimension_numbers = #tpu.dot_dimension_numbers<[1], [1], [0], [0], [0, 0, 1, 0], [], []>} : vector<8x8xbf16>, vector<8x8xbf16>, vector<8x8xf32> -> vector<8x8xf32>
    %36 = tpu.concatenate %14, %17, %20, %23, %26, %29, %32, %35 in 0 : vector<8x8xf32>, vector<8x8xf32>, vector<8x8xf32>, vector<8x8xf32>, vector<8x8xf32>, vector<8x8xf32>, vector<8x8xf32>, vector<8x8xf32> -> vector<64x8xf32>
    %c0_13 = arith.constant 0 : index
    %c0_14 = arith.constant 0 : index
    %37 = vector.load %arg1[%c0_13, %c0_14] : memref<64x8xf32, #tpu.memory_space<vmem>>, vector<64x8xf32>
    %38 = arith.addf %36, %37 : vector<64x8xf32>
    %cst_15 = arith.constant dense<0xFF800000> : vector<64xf32>
    %39 = vector.multi_reduction <maximumf>, %38, %cst_15 [1] : vector<64x8xf32> to vector<64xf32>
    %40 = vector.shape_cast %39 : vector<64xf32> to vector<64x1xf32>
    %41 = vector.broadcast %40 : vector<64x1xf32> to vector<64x8xf32>
    %42 = arith.subf %38, %41 : vector<64x8xf32>
    %43 = math.exp %42 : vector<64x8xf32>
    %cst_16 = arith.constant dense<0.000000e+00> : vector<64xf32>
    %44 = vector.multi_reduction <add>, %43, %cst_16 [1] : vector<64x8xf32> to vector<64xf32>
    %45 = vector.shape_cast %44 : vector<64xf32> to vector<64x1xf32>
    %46 = tpu.reciprocal %45 {approx = true} : vector<64x1xf32> -> vector<64x1xf32>
    %47 = vector.broadcast %46 : vector<64x1xf32> to vector<64x8xf32>
    %48 = arith.mulf %43, %47 : vector<64x8xf32>
    %49 = arith.truncf %48 : vector<64x8xf32> to vector<64x8xbf16>
    %c0_17 = arith.constant 0 : index
    %c0_18 = arith.constant 0 : index
    %50 = vector.load %arg4[%c0_17, %c0_18] : memref<32x32xbf16, #tpu.memory_space<vmem>>, vector<32x32xbf16>
    %51 = vector.extract_strided_slice %49 {offsets = [0, 0], sizes = [8, 8], strides = [1, 1]} : vector<64x8xbf16> to vector<8x8xbf16>
    %52 = vector.extract_strided_slice %11 {offsets = [0, 0], sizes = [8, 8], strides = [1, 1]} : vector<16x32xbf16> to vector<8x8xbf16>
    %cst_19 = arith.constant dense<0.000000e+00> : vector<8x8xf32>
    %53 = tpu.matmul %51, %52, %cst_19 {dimension_numbers = #tpu.dot_dimension_numbers<[1], [0], [0], [1], [0, 0, 1, 1], [], []>} : vector<8x8xbf16>, vector<8x8xbf16>, vector<8x8xf32> -> vector<8x8xf32>
    %54 = vector.extract_strided_slice %50 {offsets = [0, 0], sizes = [8, 32], strides = [1, 1]} : vector<32x32xbf16> to vector<8x32xbf16>
    %55 = arith.truncf %53 : vector<8x8xf32> to vector<8x8xbf16>
    %cst_20 = arith.constant dense<0.000000e+00> : vector<8x32xf32>
    %56 = tpu.matmul %55, %54, %cst_20 {dimension_numbers = #tpu.dot_dimension_numbers<[1], [0], [0], [1], [0, 0, 1, 1], [], []>} : vector<8x8xbf16>, vector<8x32xbf16>, vector<8x32xf32> -> vector<8x32xf32>
    %57 = vector.extract_strided_slice %49 {offsets = [8, 0], sizes = [8, 8], strides = [1, 1]} : vector<64x8xbf16> to vector<8x8xbf16>
    %58 = vector.extract_strided_slice %11 {offsets = [0, 8], sizes = [8, 8], strides = [1, 1]} : vector<16x32xbf16> to vector<8x8xbf16>
    %cst_21 = arith.constant dense<0.000000e+00> : vector<8x8xf32>
    %59 = tpu.matmul %57, %58, %cst_21 {dimension_numbers = #tpu.dot_dimension_numbers<[1], [0], [0], [1], [0, 0, 1, 1], [], []>} : vector<8x8xbf16>, vector<8x8xbf16>, vector<8x8xf32> -> vector<8x8xf32>
    %60 = vector.extract_strided_slice %50 {offsets = [8, 0], sizes = [8, 32], strides = [1, 1]} : vector<32x32xbf16> to vector<8x32xbf16>
    %61 = arith.truncf %59 : vector<8x8xf32> to vector<8x8xbf16>
    %cst_22 = arith.constant dense<0.000000e+00> : vector<8x32xf32>
    %62 = tpu.matmul %61, %60, %cst_22 {dimension_numbers = #tpu.dot_dimension_numbers<[1], [0], [0], [1], [0, 0, 1, 1], [], []>} : vector<8x8xbf16>, vector<8x32xbf16>, vector<8x32xf32> -> vector<8x32xf32>
    %63 = arith.addf %56, %62 : vector<8x32xf32>
    %64 = vector.extract_strided_slice %49 {offsets = [16, 0], sizes = [8, 8], strides = [1, 1]} : vector<64x8xbf16> to vector<8x8xbf16>
    %65 = vector.extract_strided_slice %11 {offsets = [0, 16], sizes = [8, 8], strides = [1, 1]} : vector<16x32xbf16> to vector<8x8xbf16>
    %cst_23 = arith.constant dense<0.000000e+00> : vector<8x8xf32>
    %66 = tpu.matmul %64, %65, %cst_23 {dimension_numbers = #tpu.dot_dimension_numbers<[1], [0], [0], [1], [0, 0, 1, 1], [], []>} : vector<8x8xbf16>, vector<8x8xbf16>, vector<8x8xf32> -> vector<8x8xf32>
    %67 = vector.extract_strided_slice %50 {offsets = [16, 0], sizes = [8, 32], strides = [1, 1]} : vector<32x32xbf16> to vector<8x32xbf16>
    %68 = arith.truncf %66 : vector<8x8xf32> to vector<8x8xbf16>
    %cst_24 = arith.constant dense<0.000000e+00> : vector<8x32xf32>
    %69 = tpu.matmul %68, %67, %cst_24 {dimension_numbers = #tpu.dot_dimension_numbers<[1], [0], [0], [1], [0, 0, 1, 1], [], []>} : vector<8x8xbf16>, vector<8x32xbf16>, vector<8x32xf32> -> vector<8x32xf32>
    %70 = arith.addf %63, %69 : vector<8x32xf32>
    %71 = vector.extract_strided_slice %49 {offsets = [24, 0], sizes = [8, 8], strides = [1, 1]} : vector<64x8xbf16> to vector<8x8xbf16>
    %72 = vector.extract_strided_slice %11 {offsets = [0, 24], sizes = [8, 8], strides = [1, 1]} : vector<16x32xbf16> to vector<8x8xbf16>
    %cst_25 = arith.constant dense<0.000000e+00> : vector<8x8xf32>
    %73 = tpu.matmul %71, %72, %cst_25 {dimension_numbers = #tpu.dot_dimension_numbers<[1], [0], [0], [1], [0, 0, 1, 1], [], []>} : vector<8x8xbf16>, vector<8x8xbf16>, vector<8x8xf32> -> vector<8x8xf32>
    %74 = vector.extract_strided_slice %50 {offsets = [24, 0], sizes = [8, 32], strides = [1, 1]} : vector<32x32xbf16> to vector<8x32xbf16>
    %75 = arith.truncf %73 : vector<8x8xf32> to vector<8x8xbf16>
    %cst_26 = arith.constant dense<0.000000e+00> : vector<8x32xf32>
    %76 = tpu.matmul %75, %74, %cst_26 {dimension_numbers = #tpu.dot_dimension_numbers<[1], [0], [0], [1], [0, 0, 1, 1], [], []>} : vector<8x8xbf16>, vector<8x32xbf16>, vector<8x32xf32> -> vector<8x32xf32>
    %77 = arith.addf %70, %76 : vector<8x32xf32>
    %c0_27 = arith.constant 0 : index
    %c0_28 = arith.constant 0 : index
    %78 = vector.load %arg5[%c0_27, %c0_28] : memref<1x32xf32, #tpu.memory_space<vmem>>, vector<1x32xf32>
    %79 = vector.broadcast %78 : vector<1x32xf32> to vector<8x32xf32>
    %80 = arith.addf %77, %79 : vector<8x32xf32>
    %81 = vector.extract_strided_slice %49 {offsets = [32, 0], sizes = [8, 8], strides = [1, 1]} : vector<64x8xbf16> to vector<8x8xbf16>
    %82 = vector.extract_strided_slice %11 {offsets = [8, 0], sizes = [8, 8], strides = [1, 1]} : vector<16x32xbf16> to vector<8x8xbf16>
    %cst_29 = arith.constant dense<0.000000e+00> : vector<8x8xf32>
    %83 = tpu.matmul %81, %82, %cst_29 {dimension_numbers = #tpu.dot_dimension_numbers<[1], [0], [0], [1], [0, 0, 1, 1], [], []>} : vector<8x8xbf16>, vector<8x8xbf16>, vector<8x8xf32> -> vector<8x8xf32>
    %84 = vector.extract_strided_slice %50 {offsets = [0, 0], sizes = [8, 32], strides = [1, 1]} : vector<32x32xbf16> to vector<8x32xbf16>
    %85 = arith.truncf %83 : vector<8x8xf32> to vector<8x8xbf16>
    %cst_30 = arith.constant dense<0.000000e+00> : vector<8x32xf32>
    %86 = tpu.matmul %85, %84, %cst_30 {dimension_numbers = #tpu.dot_dimension_numbers<[1], [0], [0], [1], [0, 0, 1, 1], [], []>} : vector<8x8xbf16>, vector<8x32xbf16>, vector<8x32xf32> -> vector<8x32xf32>
    %87 = vector.extract_strided_slice %49 {offsets = [40, 0], sizes = [8, 8], strides = [1, 1]} : vector<64x8xbf16> to vector<8x8xbf16>
    %88 = vector.extract_strided_slice %11 {offsets = [8, 8], sizes = [8, 8], strides = [1, 1]} : vector<16x32xbf16> to vector<8x8xbf16>
    %cst_31 = arith.constant dense<0.000000e+00> : vector<8x8xf32>
    %89 = tpu.matmul %87, %88, %cst_31 {dimension_numbers = #tpu.dot_dimension_numbers<[1], [0], [0], [1], [0, 0, 1, 1], [], []>} : vector<8x8xbf16>, vector<8x8xbf16>, vector<8x8xf32> -> vector<8x8xf32>
    %90 = vector.extract_strided_slice %50 {offsets = [8, 0], sizes = [8, 32], strides = [1, 1]} : vector<32x32xbf16> to vector<8x32xbf16>
    %91 = arith.truncf %89 : vector<8x8xf32> to vector<8x8xbf16>
    %cst_32 = arith.constant dense<0.000000e+00> : vector<8x32xf32>
    %92 = tpu.matmul %91, %90, %cst_32 {dimension_numbers = #tpu.dot_dimension_numbers<[1], [0], [0], [1], [0, 0, 1, 1], [], []>} : vector<8x8xbf16>, vector<8x32xbf16>, vector<8x32xf32> -> vector<8x32xf32>
    %93 = arith.addf %86, %92 : vector<8x32xf32>
    %94 = vector.extract_strided_slice %49 {offsets = [48, 0], sizes = [8, 8], strides = [1, 1]} : vector<64x8xbf16> to vector<8x8xbf16>
    %95 = vector.extract_strided_slice %11 {offsets = [8, 16], sizes = [8, 8], strides = [1, 1]} : vector<16x32xbf16> to vector<8x8xbf16>
    %cst_33 = arith.constant dense<0.000000e+00> : vector<8x8xf32>
    %96 = tpu.matmul %94, %95, %cst_33 {dimension_numbers = #tpu.dot_dimension_numbers<[1], [0], [0], [1], [0, 0, 1, 1], [], []>} : vector<8x8xbf16>, vector<8x8xbf16>, vector<8x8xf32> -> vector<8x8xf32>
    %97 = vector.extract_strided_slice %50 {offsets = [16, 0], sizes = [8, 32], strides = [1, 1]} : vector<32x32xbf16> to vector<8x32xbf16>
    %98 = arith.truncf %96 : vector<8x8xf32> to vector<8x8xbf16>
    %cst_34 = arith.constant dense<0.000000e+00> : vector<8x32xf32>
    %99 = tpu.matmul %98, %97, %cst_34 {dimension_numbers = #tpu.dot_dimension_numbers<[1], [0], [0], [1], [0, 0, 1, 1], [], []>} : vector<8x8xbf16>, vector<8x32xbf16>, vector<8x32xf32> -> vector<8x32xf32>
    %100 = arith.addf %93, %99 : vector<8x32xf32>
    %101 = vector.extract_strided_slice %49 {offsets = [56, 0], sizes = [8, 8], strides = [1, 1]} : vector<64x8xbf16> to vector<8x8xbf16>
    %102 = vector.extract_strided_slice %11 {offsets = [8, 24], sizes = [8, 8], strides = [1, 1]} : vector<16x32xbf16> to vector<8x8xbf16>
    %cst_35 = arith.constant dense<0.000000e+00> : vector<8x8xf32>
    %103 = tpu.matmul %101, %102, %cst_35 {dimension_numbers = #tpu.dot_dimension_numbers<[1], [0], [0], [1], [0, 0, 1, 1], [], []>} : vector<8x8xbf16>, vector<8x8xbf16>, vector<8x8xf32> -> vector<8x8xf32>
    %104 = vector.extract_strided_slice %50 {offsets = [24, 0], sizes = [8, 32], strides = [1, 1]} : vector<32x32xbf16> to vector<8x32xbf16>
    %105 = arith.truncf %103 : vector<8x8xf32> to vector<8x8xbf16>
    %cst_36 = arith.constant dense<0.000000e+00> : vector<8x32xf32>
    %106 = tpu.matmul %105, %104, %cst_36 {dimension_numbers = #tpu.dot_dimension_numbers<[1], [0], [0], [1], [0, 0, 1, 1], [], []>} : vector<8x8xbf16>, vector<8x32xbf16>, vector<8x32xf32> -> vector<8x32xf32>
    %107 = arith.addf %100, %106 : vector<8x32xf32>
    %c0_37 = arith.constant 0 : index
    %c0_38 = arith.constant 0 : index
    %108 = vector.load %arg5[%c0_37, %c0_38] : memref<1x32xf32, #tpu.memory_space<vmem>>, vector<1x32xf32>
    %109 = vector.broadcast %108 : vector<1x32xf32> to vector<8x32xf32>
    %110 = arith.addf %107, %109 : vector<8x32xf32>
    %111 = tpu.concatenate %80, %110 in 0 : vector<8x32xf32>, vector<8x32xf32> -> vector<16x32xf32>
    %c0_39 = arith.constant 0 : index
    %c0_40 = arith.constant 0 : index
    %112 = vector.load %arg6[%c0_39, %c0_40] : memref<16x32xf32, #tpu.memory_space<vmem>>, vector<16x32xf32>
    tpu.vector_store %arg6[%c0_39, %c0_40], %111 {strides = array<i32>} : memref<16x32xf32, #tpu.memory_space<vmem>>, vector<16x32xf32>,
    return
  }
}

</mosaic_0001>

<llo_original>
// kernel: tpu_custom_call.1
$region0: #{tpu_custom_call.1}
  #allocation0 [shape = 'u32[]', space=smem, size = 0x4, offset = 0x4, fixed_abs, tag = 'smem constant byte address 0x4 - core index']
  #allocation1 [shape = 'u32[144,128]{1,0:T(1,128)}', space=vmem, size = 0x12000, scoped, tag = 'internal scratch']
  %s0 = inlined_call_operand.vmem [shape: bf16[48,32], index: 0, kind: input, shape index: {}]
  %s1 = inlined_call_operand.vmem [shape: f32[64,8], index: 1, kind: input, shape index: {}]
  %s2 = inlined_call_operand.vmem [shape: bf16[32,96], index: 2, kind: input, shape index: {}]
  %s3 = inlined_call_operand.vmem [shape: f32[1,96], index: 3, kind: input, shape index: {}]
  %s4 = inlined_call_operand.vmem [shape: bf16[32,32], index: 4, kind: input, shape index: {}]
  %s5 = inlined_call_operand.vmem [shape: f32[1,32], index: 5, kind: input, shape index: {}]
  %s6 = inlined_call_operand.hbm [shape: f32[16,32], index: 6, kind: output, shape index: {}]
  %s7 = sld [smem:[#allocation0]]
  $region34: #{tpu_custom_call.1} parent=0
    _
  %s9 = ssub.s32 1, %s7
  %s10 = scalar_select 0, %s9, %s7
  $region1: #{tpu_custom_call.1} parent=0
    #allocation2 [shape = 'u8[8192]{0}', space=vmem, size = 0x2000, scoped, tag = 'output window, operand 0, single buffered']
    #allocation3 [shape = 's32[1]{0}', space=sflag, size = 0x4, scoped, tag = 'scoped memory for tpu_custom_call.1']
    %11 = vsyncpa [#allocation3], 0
    // Predicated region
    $region2: #{tpu_custom_call.1} parent=1 // pred_check
      _
    $region3: #{tpu_custom_call.1} parent=1 // pred_check_branch
      %13 = sbr.rel (0) target = $region5
    $region4: #{tpu_custom_call.1} parent=1 // pred_region
      _
    $region5: #{tpu_custom_call.1} parent=1 // pred_fallthru
      _
    // Predicated region
    $region6: #{tpu_custom_call.1} parent=1 // pred_check
      _
    $region7: #{tpu_custom_call.1} parent=1 // pred_check_branch
      %15 = sbr.rel (0) target = $region9
    $region8: #{tpu_custom_call.1} parent=1 // pred_region
      _
    $region9: #{tpu_custom_call.1} parent=1 // pred_fallthru
      _
    // Predicated region
    $region10: #{tpu_custom_call.1} parent=1 // pred_check
      _
    $region11: #{tpu_custom_call.1} parent=1 // pred_check_branch
      %17 = sbr.rel (0) target = $region13
    $region12: #{tpu_custom_call.1} parent=1 // pred_region
      _
    $region13: #{tpu_custom_call.1} parent=1 // pred_fallthru
      _
    // Predicated region
    $region14: #{tpu_custom_call.1} parent=1 // pred_check
      _
    $region15: #{tpu_custom_call.1} parent=1 // pred_check_branch
      %19 = sbr.rel (0) target = $region17
    $region16: #{tpu_custom_call.1} parent=1 // pred_region
      _
    $region17: #{tpu_custom_call.1} parent=1 // pred_fallthru
      _
    // Predicated region
    $region18: #{tpu_custom_call.1} parent=1 // pred_check
      _
    $region19: #{tpu_custom_call.1} parent=1 // pred_check_branch
      %21 = sbr.rel (0) target = $region21
    $region20: #{tpu_custom_call.1} parent=1 // pred_region
      _
    $region21: #{tpu_custom_call.1} parent=1 // pred_fallthru
      _
    // Predicated region
    $region22: #{tpu_custom_call.1} parent=1 // pred_check
      _
    $region23: #{tpu_custom_call.1} parent=1 // pred_check_branch
      %23 = sbr.rel (0) target = $region25
    $region24: #{tpu_custom_call.1} parent=1 // pred_region
      _
    $region25: #{tpu_custom_call.1} parent=1 // pred_fallthru
      _
    %v25 = vld [vmem:[%s0] sm:$0xf]
    %v26 = vld [vmem:[%s0 + $0x4] sm:$0xf]
    %v27 = vld [vmem:[%s0 + $0x8] sm:$0xf]
    %v28 = vld [vmem:[%s0 + $0xc] sm:$0xf]
    %v29 = vld [vmem:[%s0 + $0x10] sm:$0xf]
    %v30 = vld [vmem:[%s0 + $0x14] sm:$0xf]
    %v31 = vld [vmem:[%s2] sm:$0xf]
    %v32 = vld [vmem:[%s2 + $0x4] sm:$0xf]
    %v33 = vld [vmem:[%s2 + $0x8] sm:$0xf]
    %v34 = vld [vmem:[%s2 + $0xc] sm:$0xf]
    %v35 = vld [vmem:[%s3] sm:$0x1]
    %v37 = vlaneseq
    %v38 = vshrl.u32 %v37, 7
    %v39 = vsub.s32 0, %v38
    %v40 = vrot.slane %v35, %v39
    %v48 = vunpack.c.l.b16 %v25
    %v49 = vunpack.c.l.b16 %v26
    %v50 = vunpack.c.l.b16 %v27
    %v51 = vunpack.c.l.b16 %v28
    %v52 = vunpack.c.l.b16 %v29
    %v53 = vunpack.c.l.b16 %v30
    %v54 = vpack.c.b16 %v49, %v48
    %v55 = vpack.c.b16 %v51, %v50
    %v56 = vpack.c.b16 %v53, %v52
    %v61 = vunpack.c.l.b16 %v31
    %v62 = vunpack.c.l.b16 %v32
    %v63 = vunpack.c.l.b16 %v33
    %v64 = vunpack.c.l.b16 %v34
    %v65 = vpack.c.b16 %v62, %v61
    %v66 = vpack.c.b16 %v64, %v63
    %vm69 = vcmask 261120
    %v71 = vsel %vm69, %v54, 0
    %v74 = vsel %vm69, %v55, 0
    %v77 = vsel %vm69, %v56, 0
    %79 = vmatprep.subr.bf16.mxu0 0
    %80 = vmatpush1.bf16.msra.mxu0 %v65
    %81 = vmatprep.subr.bf16.mxu0 0
    %82 = vmatpush1.bf16.msra.mxu0 %v66
    %83 = vmatprep.subr.bf16.mxu0 0
    %84 = vmatpush1.bf16.msra.mxu0 0
    %85 = vmatprep.subr.bf16.mxu0 0
    %86 = vmatpush1.bf16.msra.mxu0 0
    %87 = vmatprep.subr.bf16.mxu0 0
    %88 = vmatpush1.bf16.msra.mxu0 0
    %89 = vmatprep.subr.bf16.mxu0 0
    %90 = vmatpush1.bf16.msra.mxu0 0
    %91 = vmatprep.subr.bf16.mxu0 0
    %92 = vmatpush1.bf16.msra.mxu0 0
    %93 = vmatprep.subr.bf16.mxu0 0
    %94 = vmatpush1.bf16.msra.mxu0 0
    %95 = vmatprep.subr.bf16.mxu0 0
    %96 = vmatpush1.bf16.msra.mxu0 0
    %97 = vmatprep.subr.bf16.mxu0 0
    %98 = vmatpush1.bf16.msra.mxu0 0
    %99 = vmatprep.subr.bf16.mxu0 0
    %100 = vmatpush1.bf16.msra.mxu0 0
    %101 = vmatprep.subr.bf16.mxu0 0
    %102 = vmatpush1.bf16.msra.mxu0 0
    %103 = vmatprep.subr.bf16.mxu0 0
    %104 = vmatpush1.bf16.msra.mxu0 0
    %105 = vmatprep.subr.bf16.mxu0 0
    %106 = vmatpush1.bf16.msra.mxu0 0
    %107 = vmatprep.subr.bf16.mxu0 0
    %108 = vmatpush1.bf16.msra.mxu0 0
    %109 = vmatprep.subr.bf16.mxu0 0
    %110 = vmatpush1.bf16.msra.mxu0 0
    %111 = vmatprep.mubr.bf16.mxu0 0
    %112 = vmatmul.mubr.bf16.gmra.mrb[0].mxu0 %v71
    %v113 = vpop.f32.mrb[0].mxu0
    %v114 = vadd.f32 %v40, %v113
    %v115 = vpop.f32.mrb[0].mxu0
    %v116 = vpop.f32.mrb[0].mxu0
    %v117 = vadd.f32 %v40, %v116
    %v118 = vpop.f32.mrb[0].mxu0
    %119 = vmatprep.mubr.bf16.mxu0 0
    %120 = vmatmul.mubr.bf16.gmra.mrb[0].mxu0 %v74
    %v121 = vpop.f32.mrb[0].mxu0
    %v122 = vadd.f32 %v40, %v121
    %v123 = vpop.f32.mrb[0].mxu0
    %v124 = vpop.f32.mrb[0].mxu0
    %v125 = vadd.f32 %v40, %v124
    %v126 = vpop.f32.mrb[0].mxu0
    %127 = vmatprep.mubr.bf16.mxu0 0
    %128 = vmatmul.mubr.bf16.gmra.mrb[0].mxu0 %v77
    %v129 = vpop.f32.mrb[0].mxu0
    %v130 = vadd.f32 %v40, %v129
    %v131 = vpop.f32.mrb[0].mxu0
    %v132 = vpop.f32.mrb[0].mxu0
    %v133 = vadd.f32 %v40, %v132
    %v134 = vpop.f32.mrb[0].mxu0
    %135 = vdwg.mxu0
    %v136 = vpack.c.bf16 %v117, %v114
    %v137 = vpack.c.bf16 %v125, %v122
    %v138 = vpack.c.bf16 %v133, %v130
    %140 = vrot.lane.b32.xlu0 %v137, 96
    %v141 = vpop.permute.xlu0 %140
    %vm142 = vcmask 64512
    %v144 = vsel %vm142, %v136, 0
    %v147 = vsel %vm142, %v141, 0
    %149 = vmatprep.subr.bf16.mxu0 0
    %150 = vmatpush1.bf16.xpose.msra.mxu0 %v147
    %151 = vmatprep.subr.bf16.mxu0 0
    %152 = vmatpush1.bf16.xpose.msra.mxu0 0
    %153 = vmatprep.subr.bf16.mxu0 0
    %154 = vmatpush1.bf16.xpose.msra.mxu0 0
    %155 = vmatprep.subr.bf16.mxu0 0
    %156 = vmatpush1.bf16.xpose.msra.mxu0 0
    %157 = vmatprep.subr.bf16.mxu0 0
    %158 = vmatpush1.bf16.xpose.msra.mxu0 0
    %159 = vmatprep.subr.bf16.mxu0 0
    %160 = vmatpush1.bf16.xpose.msra.mxu0 0
    %161 = vmatprep.subr.bf16.mxu0 0
    %162 = vmatpush1.bf16.xpose.msra.mxu0 0
    %163 = vmatprep.subr.bf16.mxu0 0
    %164 = vmatpush1.bf16.xpose.msra.mxu0 0
    %165 = vmatprep.subr.bf16.mxu0 0
    %166 = vmatpush1.bf16.xpose.msra.mxu0 0
    %167 = vmatprep.subr.bf16.mxu0 0
    %168 = vmatpush1.bf16.xpose.msra.mxu0 0
    %169 = vmatprep.subr.bf16.mxu0 0
    %170 = vmatpush1.bf16.xpose.msra.mxu0 0
    %171 = vmatprep.subr.bf16.mxu0 0
    %172 = vmatpush1.bf16.xpose.msra.mxu0 0
    %173 = vmatprep.subr.bf16.mxu0 0
    %174 = vmatpush1.bf16.xpose.msra.mxu0 0
    %175 = vmatprep.subr.bf16.mxu0 0
    %176 = vmatpush1.bf16.xpose.msra.mxu0 0
    %177 = vmatprep.subr.bf16.mxu0 0
    %178 = vmatpush1.bf16.xpose.msra.mxu0 0
    %179 = vmatprep.subr.bf16.mxu0 0
    %180 = vmatpush1.bf16.xpose.msra.mxu0 0
    %181 = vmatprep.mubr.bf16.mxu0 0
    %182 = vmatmul.mubr.bf16.gmra.mrb[0].mxu0 %v144
    %v183 = vpop.f32.mrb[0].mxu0
    %v184 = vadd.f32 0.0, %v183
    %v185 = vpop.f32.mrb[0].mxu0
    %v186 = vpop.f32.mrb[0].mxu0
    %v187 = vpop.f32.mrb[0].mxu0
    %188 = vdwg.mxu0
    %190 = vrot.lane.b32.xlu0 %v136, 120
    %v191 = vpop.permute.xlu0 %190
    %192 = vrot.lane.b32.xlu0 %v137, 88
    %v193 = vpop.permute.xlu0 %192
    %v195 = vsel %vm142, %v191, 0
    %v198 = vsel %vm142, %v193, 0
    %200 = vmatprep.subr.bf16.mxu0 0
    %201 = vmatpush1.bf16.xpose.msra.mxu0 %v198
    %202 = vmatprep.subr.bf16.mxu0 0
    %203 = vmatpush1.bf16.xpose.msra.mxu0 0
    %204 = vmatprep.subr.bf16.mxu0 0
    %205 = vmatpush1.bf16.xpose.msra.mxu0 0
    %206 = vmatprep.subr.bf16.mxu0 0
    %207 = vmatpush1.bf16.xpose.msra.mxu0 0
    %208 = vmatprep.subr.bf16.mxu0 0
    %209 = vmatpush1.bf16.xpose.msra.mxu0 0
    %210 = vmatprep.subr.bf16.mxu0 0
    %211 = vmatpush1.bf16.xpose.msra.mxu0 0
    %212 = vmatprep.subr.bf16.mxu0 0
    %213 = vmatpush1.bf16.xpose.msra.mxu0 0
    %214 = vmatprep.subr.bf16.mxu0 0
    %215 = vmatpush1.bf16.xpose.msra.mxu0 0
    %216 = vmatprep.subr.bf16.mxu0 0
    %217 = vmatpush1.bf16.xpose.msra.mxu0 0
    %218 = vmatprep.subr.bf16.mxu0 0
    %219 = vmatpush1.bf16.xpose.msra.mxu0 0
    %220 = vmatprep.subr.bf16.mxu0 0
    %221 = vmatpush1.bf16.xpose.msra.mxu0 0
    %222 = vmatprep.subr.bf16.mxu0 0
    %223 = vmatpush1.bf16.xpose.msra.mxu0 0
    %224 = vmatprep.subr.bf16.mxu0 0
    %225 = vmatpush1.bf16.xpose.msra.mxu0 0
    %226 = vmatprep.subr.bf16.mxu0 0
    %227 = vmatpush1.bf16.xpose.msra.mxu0 0
    %228 = vmatprep.subr.bf16.mxu0 0
    %229 = vmatpush1.bf16.xpose.msra.mxu0 0
    %230 = vmatprep.subr.bf16.mxu0 0
    %231 = vmatpush1.bf16.xpose.msra.mxu0 0
    %232 = vmatprep.mubr.bf16.mxu0 0
    %233 = vmatmul.mubr.bf16.gmra.mrb[0].mxu0 %v195
    %v234 = vpop.f32.mrb[0].mxu0
    %v235 = vadd.f32 0.0, %v234
    %v236 = vpop.f32.mrb[0].mxu0
    %v237 = vpop.f32.mrb[0].mxu0
    %v238 = vpop.f32.mrb[0].mxu0
    %239 = vdwg.mxu0
    %240 = vrot.lane.b32.xlu0 %v136, 112
    %v241 = vpop.permute.xlu0 %240
    %242 = vrot.lane.b32.xlu0 %v137, 80
    %v243 = vpop.permute.xlu0 %242
    %v245 = vsel %vm142, %v241, 0
    %v248 = vsel %vm142, %v243, 0
    %250 = vmatprep.subr.bf16.mxu0 0
    %251 = vmatpush1.bf16.xpose.msra.mxu0 %v248
    %252 = vmatprep.subr.bf16.mxu0 0
    %253 = vmatpush1.bf16.xpose.msra.mxu0 0
    %254 = vmatprep.subr.bf16.mxu0 0
    %255 = vmatpush1.bf16.xpose.msra.mxu0 0
    %256 = vmatprep.subr.bf16.mxu0 0
    %257 = vmatpush1.bf16.xpose.msra.mxu0 0
    %258 = vmatprep.subr.bf16.mxu0 0
    %259 = vmatpush1.bf16.xpose.msra.mxu0 0
    %260 = vmatprep.subr.bf16.mxu0 0
    %261 = vmatpush1.bf16.xpose.msra.mxu0 0
    %262 = vmatprep.subr.bf16.mxu0 0
    %263 = vmatpush1.bf16.xpose.msra.mxu0 0
    %264 = vmatprep.subr.bf16.mxu0 0
    %265 = vmatpush1.bf16.xpose.msra.mxu0 0
    %266 = vmatprep.subr.bf16.mxu0 0
    %267 = vmatpush1.bf16.xpose.msra.mxu0 0
    %268 = vmatprep.subr.bf16.mxu0 0
    %269 = vmatpush1.bf16.xpose.msra.mxu0 0
    %270 = vmatprep.subr.bf16.mxu0 0
    %271 = vmatpush1.bf16.xpose.msra.mxu0 0
    %272 = vmatprep.subr.bf16.mxu0 0
    %273 = vmatpush1.bf16.xpose.msra.mxu0 0
    %274 = vmatprep.subr.bf16.mxu0 0
    %275 = vmatpush1.bf16.xpose.msra.mxu0 0
    %276 = vmatprep.subr.bf16.mxu0 0
    %277 = vmatpush1.bf16.xpose.msra.mxu0 0
    %278 = vmatprep.subr.bf16.mxu0 0
    %279 = vmatpush1.bf16.xpose.msra.mxu0 0
    %280 = vmatprep.subr.bf16.mxu0 0
    %281 = vmatpush1.bf16.xpose.msra.mxu0 0
    %282 = vmatprep.mubr.bf16.mxu0 0
    %283 = vmatmul.mubr.bf16.gmra.mrb[0].mxu0 %v245
    %v284 = vpop.f32.mrb[0].mxu0
    %v285 = vadd.f32 0.0, %v284
    %v286 = vpop.f32.mrb[0].mxu0
    %v287 = vpop.f32.mrb[0].mxu0
    %v288 = vpop.f32.mrb[0].mxu0
    %289 = vdwg.mxu0
    %290 = vrot.lane.b32.xlu0 %v136, 104
    %v291 = vpop.permute.xlu0 %290
    %292 = vrot.lane.b32.xlu0 %v137, 72
    %v293 = vpop.permute.xlu0 %292
    %v295 = vsel %vm142, %v291, 0
    %v298 = vsel %vm142, %v293, 0
    %300 = vmatprep.subr.bf16.mxu0 0
    %301 = vmatpush1.bf16.xpose.msra.mxu0 %v298
    %302 = vmatprep.subr.bf16.mxu0 0
    %303 = vmatpush1.bf16.xpose.msra.mxu0 0
    %304 = vmatprep.subr.bf16.mxu0 0
    %305 = vmatpush1.bf16.xpose.msra.mxu0 0
    %306 = vmatprep.subr.bf16.mxu0 0
    %307 = vmatpush1.bf16.xpose.msra.mxu0 0
    %308 = vmatprep.subr.bf16.mxu0 0
    %309 = vmatpush1.bf16.xpose.msra.mxu0 0
    %310 = vmatprep.subr.bf16.mxu0 0
    %311 = vmatpush1.bf16.xpose.msra.mxu0 0
    %312 = vmatprep.subr.bf16.mxu0 0
    %313 = vmatpush1.bf16.xpose.msra.mxu0 0
    %314 = vmatprep.subr.bf16.mxu0 0
    %315 = vmatpush1.bf16.xpose.msra.mxu0 0
    %316 = vmatprep.subr.bf16.mxu0 0
    %317 = vmatpush1.bf16.xpose.msra.mxu0 0
    %318 = vmatprep.subr.bf16.mxu0 0
    %319 = vmatpush1.bf16.xpose.msra.mxu0 0
    %320 = vmatprep.subr.bf16.mxu0 0
    %321 = vmatpush1.bf16.xpose.msra.mxu0 0
    %322 = vmatprep.subr.bf16.mxu0 0
    %323 = vmatpush1.bf16.xpose.msra.mxu0 0
    %324 = vmatprep.subr.bf16.mxu0 0
    %325 = vmatpush1.bf16.xpose.msra.mxu0 0
    %326 = vmatprep.subr.bf16.mxu0 0
    %327 = vmatpush1.bf16.xpose.msra.mxu0 0
    %328 = vmatprep.subr.bf16.mxu0 0
    %329 = vmatpush1.bf16.xpose.msra.mxu0 0
    %330 = vmatprep.subr.bf16.mxu0 0
    %331 = vmatpush1.bf16.xpose.msra.mxu0 0
    %332 = vmatprep.mubr.bf16.mxu0 0
    %333 = vmatmul.mubr.bf16.gmra.mrb[0].mxu0 %v295
    %v334 = vpop.f32.mrb[0].mxu0
    %v335 = vadd.f32 0.0, %v334
    %v336 = vpop.f32.mrb[0].mxu0
    %v337 = vpop.f32.mrb[0].mxu0
    %v338 = vpop.f32.mrb[0].mxu0
    %339 = vdwg.mxu0
    %v340 = vrot.slane %v136, 4
    %v341 = vrot.slane %v137, 4
    %342 = vrot.lane.b32.xlu0 %v341, 96
    %v343 = vpop.permute.xlu0 %342
    %v345 = vsel %vm142, %v340, 0
    %v348 = vsel %vm142, %v343, 0
    %350 = vmatprep.subr.bf16.mxu0 0
    %351 = vmatpush1.bf16.xpose.msra.mxu0 %v348
    %352 = vmatprep.subr.bf16.mxu0 0
    %353 = vmatpush1.bf16.xpose.msra.mxu0 0
    %354 = vmatprep.subr.bf16.mxu0 0
    %355 = vmatpush1.bf16.xpose.msra.mxu0 0
    %356 = vmatprep.subr.bf16.mxu0 0
    %357 = vmatpush1.bf16.xpose.msra.mxu0 0
    %358 = vmatprep.subr.bf16.mxu0 0
    %359 = vmatpush1.bf16.xpose.msra.mxu0 0
    %360 = vmatprep.subr.bf16.mxu0 0
    %361 = vmatpush1.bf16.xpose.msra.mxu0 0
    %362 = vmatprep.subr.bf16.mxu0 0
    %363 = vmatpush1.bf16.xpose.msra.mxu0 0
    %364 = vmatprep.subr.bf16.mxu0 0
    %365 = vmatpush1.bf16.xpose.msra.mxu0 0
    %366 = vmatprep.subr.bf16.mxu0 0
    %367 = vmatpush1.bf16.xpose.msra.mxu0 0
    %368 = vmatprep.subr.bf16.mxu0 0
    %369 = vmatpush1.bf16.xpose.msra.mxu0 0
    %370 = vmatprep.subr.bf16.mxu0 0
    %371 = vmatpush1.bf16.xpose.msra.mxu0 0
    %372 = vmatprep.subr.bf16.mxu0 0
    %373 = vmatpush1.bf16.xpose.msra.mxu0 0
    %374 = vmatprep.subr.bf16.mxu0 0
    %375 = vmatpush1.bf16.xpose.msra.mxu0 0
    %376 = vmatprep.subr.bf16.mxu0 0
    %377 = vmatpush1.bf16.xpose.msra.mxu0 0
    %378 = vmatprep.subr.bf16.mxu0 0
    %379 = vmatpush1.bf16.xpose.msra.mxu0 0
    %380 = vmatprep.subr.bf16.mxu0 0
    %381 = vmatpush1.bf16.xpose.msra.mxu0 0
    %382 = vmatprep.mubr.bf16.mxu0 0
    %383 = vmatmul.mubr.bf16.gmra.mrb[0].mxu0 %v345
    %v384 = vpop.f32.mrb[0].mxu0
    %v385 = vadd.f32 0.0, %v384
    %v386 = vpop.f32.mrb[0].mxu0
    %v387 = vpop.f32.mrb[0].mxu0
    %v388 = vpop.f32.mrb[0].mxu0
    %389 = vdwg.mxu0
    %390 = vrot.lane.b32.xlu0 %v340, 120
    %v391 = vpop.permute.xlu0 %390
    %392 = vrot.lane.b32.xlu0 %v341, 88
    %v393 = vpop.permute.xlu0 %392
    %v395 = vsel %vm142, %v391, 0
    %v398 = vsel %vm142, %v393, 0
    %400 = vmatprep.subr.bf16.mxu0 0
    %401 = vmatpush1.bf16.xpose.msra.mxu0 %v398
    %402 = vmatprep.subr.bf16.mxu0 0
    %403 = vmatpush1.bf16.xpose.msra.mxu0 0
    %404 = vmatprep.subr.bf16.mxu0 0
    %405 = vmatpush1.bf16.xpose.msra.mxu0 0
    %406 = vmatprep.subr.bf16.mxu0 0
    %407 = vmatpush1.bf16.xpose.msra.mxu0 0
    %408 = vmatprep.subr.bf16.mxu0 0
    %409 = vmatpush1.bf16.xpose.msra.mxu0 0
    %410 = vmatprep.subr.bf16.mxu0 0
    %411 = vmatpush1.bf16.xpose.msra.mxu0 0
    %412 = vmatprep.subr.bf16.mxu0 0
    %413 = vmatpush1.bf16.xpose.msra.mxu0 0
    %414 = vmatprep.subr.bf16.mxu0 0
    %415 = vmatpush1.bf16.xpose.msra.mxu0 0
    %416 = vmatprep.subr.bf16.mxu0 0
    %417 = vmatpush1.bf16.xpose.msra.mxu0 0
    %418 = vmatprep.subr.bf16.mxu0 0
    %419 = vmatpush1.bf16.xpose.msra.mxu0 0
    %420 = vmatprep.subr.bf16.mxu0 0
    %421 = vmatpush1.bf16.xpose.msra.mxu0 0
    %422 = vmatprep.subr.bf16.mxu0 0
    %423 = vmatpush1.bf16.xpose.msra.mxu0 0
    %424 = vmatprep.subr.bf16.mxu0 0
    %425 = vmatpush1.bf16.xpose.msra.mxu0 0
    %426 = vmatprep.subr.bf16.mxu0 0
    %427 = vmatpush1.bf16.xpose.msra.mxu0 0
    %428 = vmatprep.subr.bf16.mxu0 0
    %429 = vmatpush1.bf16.xpose.msra.mxu0 0
    %430 = vmatprep.subr.bf16.mxu0 0
    %431 = vmatpush1.bf16.xpose.msra.mxu0 0
    %432 = vmatprep.mubr.bf16.mxu0 0
    %433 = vmatmul.mubr.bf16.gmra.mrb[0].mxu0 %v395
    %v434 = vpop.f32.mrb[0].mxu0
    %v435 = vadd.f32 0.0, %v434
    %v436 = vpop.f32.mrb[0].mxu0
    %v437 = vpop.f32.mrb[0].mxu0
    %v438 = vpop.f32.mrb[0].mxu0
    %439 = vdwg.mxu0
    %440 = vrot.lane.b32.xlu0 %v340, 112
    %v441 = vpop.permute.xlu0 %440
    %442 = vrot.lane.b32.xlu0 %v341, 80
    %v443 = vpop.permute.xlu0 %442
    %v445 = vsel %vm142, %v441, 0
    %v448 = vsel %vm142, %v443, 0
    %450 = vmatprep.subr.bf16.mxu0 0
    %451 = vmatpush1.bf16.xpose.msra.mxu0 %v448
    %452 = vmatprep.subr.bf16.mxu0 0
    %453 = vmatpush1.bf16.xpose.msra.mxu0 0
    %454 = vmatprep.subr.bf16.mxu0 0
    %455 = vmatpush1.bf16.xpose.msra.mxu0 0
    %456 = vmatprep.subr.bf16.mxu0 0
    %457 = vmatpush1.bf16.xpose.msra.mxu0 0
    %458 = vmatprep.subr.bf16.mxu0 0
    %459 = vmatpush1.bf16.xpose.msra.mxu0 0
    %460 = vmatprep.subr.bf16.mxu0 0
    %461 = vmatpush1.bf16.xpose.msra.mxu0 0
    %462 = vmatprep.subr.bf16.mxu0 0
    %463 = vmatpush1.bf16.xpose.msra.mxu0 0
    %464 = vmatprep.subr.bf16.mxu0 0
    %465 = vmatpush1.bf16.xpose.msra.mxu0 0
    %466 = vmatprep.subr.bf16.mxu0 0
    %467 = vmatpush1.bf16.xpose.msra.mxu0 0
    %468 = vmatprep.subr.bf16.mxu0 0
    %469 = vmatpush1.bf16.xpose.msra.mxu0 0
    %470 = vmatprep.subr.bf16.mxu0 0
    %471 = vmatpush1.bf16.xpose.msra.mxu0 0
    %472 = vmatprep.subr.bf16.mxu0 0
    %473 = vmatpush1.bf16.xpose.msra.mxu0 0
    %474 = vmatprep.subr.bf16.mxu0 0
    %475 = vmatpush1.bf16.xpose.msra.mxu0 0
    %476 = vmatprep.subr.bf16.mxu0 0
    %477 = vmatpush1.bf16.xpose.msra.mxu0 0
    %478 = vmatprep.subr.bf16.mxu0 0
    %479 = vmatpush1.bf16.xpose.msra.mxu0 0
    %480 = vmatprep.subr.bf16.mxu0 0
    %481 = vmatpush1.bf16.xpose.msra.mxu0 0
    %482 = vmatprep.mubr.bf16.mxu0 0
    %483 = vmatmul.mubr.bf16.gmra.mrb[0].mxu0 %v445
    %v484 = vpop.f32.mrb[0].mxu0
    %v485 = vadd.f32 0.0, %v484
    %v486 = vpop.f32.mrb[0].mxu0
    %v487 = vpop.f32.mrb[0].mxu0
    %v488 = vpop.f32.mrb[0].mxu0
    %489 = vdwg.mxu0
    %490 = vrot.lane.b32.xlu0 %v340, 104
    %v491 = vpop.permute.xlu0 %490
    %492 = vrot.lane.b32.xlu0 %v341, 72
    %v493 = vpop.permute.xlu0 %492
    %v495 = vsel %vm142, %v491, 0
    %v498 = vsel %vm142, %v493, 0
    %500 = vmatprep.subr.bf16.mxu0 0
    %501 = vmatpush1.bf16.xpose.msra.mxu0 %v498
    %502 = vmatprep.subr.bf16.mxu0 0
    %503 = vmatpush1.bf16.xpose.msra.mxu0 0
    %504 = vmatprep.subr.bf16.mxu0 0
    %505 = vmatpush1.bf16.xpose.msra.mxu0 0
    %506 = vmatprep.subr.bf16.mxu0 0
    %507 = vmatpush1.bf16.xpose.msra.mxu0 0
    %508 = vmatprep.subr.bf16.mxu0 0
    %509 = vmatpush1.bf16.xpose.msra.mxu0 0
    %510 = vmatprep.subr.bf16.mxu0 0
    %511 = vmatpush1.bf16.xpose.msra.mxu0 0
    %512 = vmatprep.subr.bf16.mxu0 0
    %513 = vmatpush1.bf16.xpose.msra.mxu0 0
    %514 = vmatprep.subr.bf16.mxu0 0
    %515 = vmatpush1.bf16.xpose.msra.mxu0 0
    %516 = vmatprep.subr.bf16.mxu0 0
    %517 = vmatpush1.bf16.xpose.msra.mxu0 0
    %518 = vmatprep.subr.bf16.mxu0 0
    %519 = vmatpush1.bf16.xpose.msra.mxu0 0
    %520 = vmatprep.subr.bf16.mxu0 0
    %521 = vmatpush1.bf16.xpose.msra.mxu0 0
    %522 = vmatprep.subr.bf16.mxu0 0
    %523 = vmatpush1.bf16.xpose.msra.mxu0 0
    %524 = vmatprep.subr.bf16.mxu0 0
    %525 = vmatpush1.bf16.xpose.msra.mxu0 0
    %526 = vmatprep.subr.bf16.mxu0 0
    %527 = vmatpush1.bf16.xpose.msra.mxu0 0
    %528 = vmatprep.subr.bf16.mxu0 0
    %529 = vmatpush1.bf16.xpose.msra.mxu0 0
    %530 = vmatprep.subr.bf16.mxu0 0
    %531 = vmatpush1.bf16.xpose.msra.mxu0 0
    %532 = vmatprep.mubr.bf16.mxu0 0
    %533 = vmatmul.mubr.bf16.gmra.mrb[0].mxu0 %v495
    %v534 = vpop.f32.mrb[0].mxu0
    %v535 = vadd.f32 0.0, %v534
    %v536 = vpop.f32.mrb[0].mxu0
    %v537 = vpop.f32.mrb[0].mxu0
    %v538 = vpop.f32.mrb[0].mxu0
    %539 = vdwg.mxu0
    %v540 = vld [vmem:[%s1] sm:$0xff]
    %v541 = vld [vmem:[%s1 + $0x8] sm:$0xff]
    %v542 = vld [vmem:[%s1 + $0x10] sm:$0xff]
    %v543 = vld [vmem:[%s1 + $0x18] sm:$0xff]
    %v544 = vld [vmem:[%s1 + $0x20] sm:$0xff]
    %v545 = vld [vmem:[%s1 + $0x28] sm:$0xff]
    %v546 = vld [vmem:[%s1 + $0x30] sm:$0xff]
    %v547 = vld [vmem:[%s1 + $0x38] sm:$0xff]
    %v548 = vadd.f32 %v184, %v540
    %v549 = vadd.f32 %v235, %v541
    %v550 = vadd.f32 %v285, %v542
    %v551 = vadd.f32 %v335, %v543
    %v552 = vadd.f32 %v385, %v544
    %v553 = vadd.f32 %v435, %v545
    %v554 = vadd.f32 %v485, %v546
    %v555 = vadd.f32 %v535, %v547
    %v556 = vsel %vm142, %v548, -inf
    %557 = vmax.xlane.f32.xlu0 %v556
    %v558 = vpop.xlane.xlu0 %557
    %v559 = vsel %vm142, %v549, -inf
    %560 = vmax.xlane.f32.xlu0 %v559
    %v561 = vpop.xlane.xlu0 %560
    %v562 = vsel %vm142, %v550, -inf
    %563 = vmax.xlane.f32.xlu0 %v562
    %v564 = vpop.xlane.xlu0 %563
    %v565 = vsel %vm142, %v551, -inf
    %566 = vmax.xlane.f32.xlu0 %v565
    %v567 = vpop.xlane.xlu0 %566
    %v568 = vsel %vm142, %v552, -inf
    %569 = vmax.xlane.f32.xlu0 %v568
    %v570 = vpop.xlane.xlu0 %569
    %v571 = vsel %vm142, %v553, -inf
    %572 = vmax.xlane.f32.xlu0 %v571
    %v573 = vpop.xlane.xlu0 %572
    %v574 = vsel %vm142, %v554, -inf
    %575 = vmax.xlane.f32.xlu0 %v574
    %v576 = vpop.xlane.xlu0 %575
    %v577 = vsel %vm142, %v555, -inf
    %578 = vmax.xlane.f32.xlu0 %v577
    %v579 = vpop.xlane.xlu0 %578
    %v580 = vsub.f32 %v548, %v558
    %v581 = vsub.f32 %v549, %v561
    %v582 = vsub.f32 %v550, %v564
    %v583 = vsub.f32 %v551, %v567
    %v584 = vsub.f32 %v552, %v570
    %v585 = vsub.f32 %v553, %v573
    %v586 = vsub.f32 %v554, %v576
    %v587 = vsub.f32 %v555, %v579
    %v588 = vmul.f32 %v580, 1.442695
    %v589 = vpow.pop %v588
    %v590 = vmul.f32 %v581, 1.442695
    %v591 = vpow.pop %v590
    %v592 = vmul.f32 %v582, 1.442695
    %v593 = vpow.pop %v592
    %v594 = vmul.f32 %v583, 1.442695
    %v595 = vpow.pop %v594
    %v596 = vmul.f32 %v584, 1.442695
    %v597 = vpow.pop %v596
    %v598 = vmul.f32 %v585, 1.442695
    %v599 = vpow.pop %v598
    %v600 = vmul.f32 %v586, 1.442695
    %v601 = vpow.pop %v600
    %v602 = vmul.f32 %v587, 1.442695
    %v603 = vpow.pop %v602
    %v604 = vsel %vm142, %v589, 0.0
    %605 = vadd.xlane.f32.xlu0 %v604
    %v606 = vpop.xlane.xlu0 %605
    %v607 = vsel %vm142, %v591, 0.0
    %608 = vadd.xlane.f32.xlu0 %v607
    %v609 = vpop.xlane.xlu0 %608
    %v610 = vsel %vm142, %v593, 0.0
    %611 = vadd.xlane.f32.xlu0 %v610
    %v612 = vpop.xlane.xlu0 %611
    %v613 = vsel %vm142, %v595, 0.0
    %614 = vadd.xlane.f32.xlu0 %v613
    %v615 = vpop.xlane.xlu0 %614
    %v616 = vsel %vm142, %v597, 0.0
    %617 = vadd.xlane.f32.xlu0 %v616
    %v618 = vpop.xlane.xlu0 %617
    %v619 = vsel %vm142, %v599, 0.0
    %620 = vadd.xlane.f32.xlu0 %v619
    %v621 = vpop.xlane.xlu0 %620
    %v622 = vsel %vm142, %v601, 0.0
    %623 = vadd.xlane.f32.xlu0 %v622
    %v624 = vpop.xlane.xlu0 %623
    %v625 = vsel %vm142, %v603, 0.0
    %626 = vadd.xlane.f32.xlu0 %v625
    %v627 = vpop.xlane.xlu0 %626
    %v628 = vrcp.pop %v606
    %v629 = vrcp.pop %v609
    %v630 = vrcp.pop %v612
    %v631 = vrcp.pop %v615
    %v632 = vrcp.pop %v618
    %v633 = vrcp.pop %v621
    %v634 = vrcp.pop %v624
    %v635 = vrcp.pop %v627
    %v636 = vmul.f32 %v589, %v628
    %v637 = vmul.f32 %v591, %v629
    %v638 = vmul.f32 %v593, %v630
    %v639 = vmul.f32 %v595, %v631
    %v640 = vmul.f32 %v597, %v632
    %v641 = vmul.f32 %v599, %v633
    %v642 = vmul.f32 %v601, %v634
    %v643 = vmul.f32 %v603, %v635
    %v644 = vpack.c.bf16 %v637, %v636
    %v645 = vpack.c.bf16 %v639, %v638
    %v646 = vpack.c.bf16 %v641, %v640
    %v647 = vpack.c.bf16 %v643, %v642
    %v648 = vld [vmem:[%s4] sm:$0xf]
    %v649 = vld [vmem:[%s4 + $0x4] sm:$0xf]
    %v650 = vld [vmem:[%s4 + $0x8] sm:$0xf]
    %v651 = vld [vmem:[%s4 + $0xc] sm:$0xf]
    %653 = vrot.lane.b32.xlu0 %v138, 64
    %v654 = vpop.permute.xlu0 %653
    %v656 = vsel %vm142, %v644, 0
    %vm658 = vcmask 1043456
    %v660 = vsel %vm658, %v654, 0
    %662 = vmatprep.subr.bf16.mxu0 0
    %663 = vmatpush1.bf16.msra.mxu0 %v660
    %664 = vmatprep.subr.bf16.mxu0 0
    %665 = vmatpush1.bf16.msra.mxu0 0
    %666 = vmatprep.subr.bf16.mxu0 0
    %667 = vmatpush1.bf16.msra.mxu0 0
    %668 = vmatprep.subr.bf16.mxu0 0
    %669 = vmatpush1.bf16.msra.mxu0 0
    %670 = vmatprep.subr.bf16.mxu0 0
    %671 = vmatpush1.bf16.msra.mxu0 0
    %672 = vmatprep.subr.bf16.mxu0 0
    %673 = vmatpush1.bf16.msra.mxu0 0
    %674 = vmatprep.subr.bf16.mxu0 0
    %675 = vmatpush1.bf16.msra.mxu0 0
    %676 = vmatprep.subr.bf16.mxu0 0
    %677 = vmatpush1.bf16.msra.mxu0 0
    %678 = vmatprep.subr.bf16.mxu0 0
    %679 = vmatpush1.bf16.msra.mxu0 0
    %680 = vmatprep.subr.bf16.mxu0 0
    %681 = vmatpush1.bf16.msra.mxu0 0
    %682 = vmatprep.subr.bf16.mxu0 0
    %683 = vmatpush1.bf16.msra.mxu0 0
    %684 = vmatprep.subr.bf16.mxu0 0
    %685 = vmatpush1.bf16.msra.mxu0 0
    %686 = vmatprep.subr.bf16.mxu0 0
    %687 = vmatpush1.bf16.msra.mxu0 0
    %688 = vmatprep.subr.bf16.mxu0 0
    %689 = vmatpush1.bf16.msra.mxu0 0
    %690 = vmatprep.subr.bf16.mxu0 0
    %691 = vmatpush1.bf16.msra.mxu0 0
    %692 = vmatprep.subr.bf16.mxu0 0
    %693 = vmatpush1.bf16.msra.mxu0 0
    %694 = vmatprep.mubr.bf16.mxu0 0
    %695 = vmatmul.mubr.bf16.gmra.mrb[0].mxu0 %v656
    %v696 = vpop.f32.mrb[0].mxu0
    %v697 = vadd.f32 0.0, %v696
    %v698 = vpop.f32.mrb[0].mxu0
    %v699 = vpop.f32.mrb[0].mxu0
    %v700 = vpop.f32.mrb[0].mxu0
    %701 = vdwg.mxu0
    %v702 = vpack.c.bf16 %v697, %v697
    %v704 = vrot.slane %v644, 4
    %705 = vrot.lane.b32.xlu0 %v138, 56
    %v706 = vpop.permute.xlu0 %705
    %v708 = vsel %vm142, %v704, 0
    %v711 = vsel %vm658, %v706, 0
    %713 = vmatprep.subr.bf16.mxu0 0
    %714 = vmatpush1.bf16.msra.mxu0 %v711
    %715 = vmatprep.subr.bf16.mxu0 0
    %716 = vmatpush1.bf16.msra.mxu0 0
    %717 = vmatprep.subr.bf16.mxu0 0
    %718 = vmatpush1.bf16.msra.mxu0 0
    %719 = vmatprep.subr.bf16.mxu0 0
    %720 = vmatpush1.bf16.msra.mxu0 0
    %721 = vmatprep.subr.bf16.mxu0 0
    %722 = vmatpush1.bf16.msra.mxu0 0
    %723 = vmatprep.subr.bf16.mxu0 0
    %724 = vmatpush1.bf16.msra.mxu0 0
    %725 = vmatprep.subr.bf16.mxu0 0
    %726 = vmatpush1.bf16.msra.mxu0 0
    %727 = vmatprep.subr.bf16.mxu0 0
    %728 = vmatpush1.bf16.msra.mxu0 0
    %729 = vmatprep.subr.bf16.mxu0 0
    %730 = vmatpush1.bf16.msra.mxu0 0
    %731 = vmatprep.subr.bf16.mxu0 0
    %732 = vmatpush1.bf16.msra.mxu0 0
    %733 = vmatprep.subr.bf16.mxu0 0
    %734 = vmatpush1.bf16.msra.mxu0 0
    %735 = vmatprep.subr.bf16.mxu0 0
    %736 = vmatpush1.bf16.msra.mxu0 0
    %737 = vmatprep.subr.bf16.mxu0 0
    %738 = vmatpush1.bf16.msra.mxu0 0
    %739 = vmatprep.subr.bf16.mxu0 0
    %740 = vmatpush1.bf16.msra.mxu0 0
    %741 = vmatprep.subr.bf16.mxu0 0
    %742 = vmatpush1.bf16.msra.mxu0 0
    %743 = vmatprep.subr.bf16.mxu0 0
    %744 = vmatpush1.bf16.msra.mxu0 0
    %745 = vmatprep.mubr.bf16.mxu0 0
    %746 = vmatmul.mubr.bf16.gmra.mrb[0].mxu0 %v708
    %v747 = vpop.f32.mrb[0].mxu0
    %v748 = vadd.f32 0.0, %v747
    %v749 = vpop.f32.mrb[0].mxu0
    %v750 = vpop.f32.mrb[0].mxu0
    %v751 = vpop.f32.mrb[0].mxu0
    %752 = vdwg.mxu0
    %v753 = vpack.c.bf16 %v748, %v748
    %v755 = vsel %vm142, %v753, 0
    %v758 = vsel %vm658, %v649, 0
    %760 = vmatprep.subr.bf16.mxu0 0
    %761 = vmatpush1.bf16.msra.mxu0 %v758
    %762 = vmatprep.subr.bf16.mxu0 0
    %763 = vmatpush1.bf16.msra.mxu0 0
    %764 = vmatprep.subr.bf16.mxu0 0
    %765 = vmatpush1.bf16.msra.mxu0 0
    %766 = vmatprep.subr.bf16.mxu0 0
    %767 = vmatpush1.bf16.msra.mxu0 0
    %768 = vmatprep.subr.bf16.mxu0 0
    %769 = vmatpush1.bf16.msra.mxu0 0
    %770 = vmatprep.subr.bf16.mxu0 0
    %771 = vmatpush1.bf16.msra.mxu0 0
    %772 = vmatprep.subr.bf16.mxu0 0
    %773 = vmatpush1.bf16.msra.mxu0 0
    %774 = vmatprep.subr.bf16.mxu0 0
    %775 = vmatpush1.bf16.msra.mxu0 0
    %776 = vmatprep.subr.bf16.mxu0 0
    %777 = vmatpush1.bf16.msra.mxu0 0
    %778 = vmatprep.subr.bf16.mxu0 0
    %779 = vmatpush1.bf16.msra.mxu0 0
    %780 = vmatprep.subr.bf16.mxu0 0
    %781 = vmatpush1.bf16.msra.mxu0 0
    %782 = vmatprep.subr.bf16.mxu0 0
    %783 = vmatpush1.bf16.msra.mxu0 0
    %784 = vmatprep.subr.bf16.mxu0 0
    %785 = vmatpush1.bf16.msra.mxu0 0
    %786 = vmatprep.subr.bf16.mxu0 0
    %787 = vmatpush1.bf16.msra.mxu0 0
    %788 = vmatprep.subr.bf16.mxu0 0
    %789 = vmatpush1.bf16.msra.mxu0 0
    %790 = vmatprep.subr.bf16.mxu0 0
    %791 = vmatpush1.bf16.msra.mxu0 0
    %792 = vmatprep.mubr.bf16.mxu0 0
    %793 = vmatmul.mubr.bf16.gmra.mrb[0].mxu0 %v755
    %v794 = vpop.f32.mrb[0].mxu0
    %v795 = vadd.f32 0.0, %v794
    %v796 = vpop.f32.mrb[0].mxu0
    %v797 = vpop.f32.mrb[0].mxu0
    %v798 = vpop.f32.mrb[0].mxu0
    %799 = vdwg.mxu0
    %v801 = vsel %vm142, %v702, 0
    %v804 = vsel %vm658, %v648, 0
    %806 = vmatprep.subr.bf16.mxu0 0
    %807 = vmatpush1.bf16.msra.mxu0 %v804
    %808 = vmatprep.subr.bf16.mxu0 0
    %809 = vmatpush1.bf16.msra.mxu0 0
    %810 = vmatprep.subr.bf16.mxu0 0
    %811 = vmatpush1.bf16.msra.mxu0 0
    %812 = vmatprep.subr.bf16.mxu0 0
    %813 = vmatpush1.bf16.msra.mxu0 0
    %814 = vmatprep.subr.bf16.mxu0 0
    %815 = vmatpush1.bf16.msra.mxu0 0
    %816 = vmatprep.subr.bf16.mxu0 0
    %817 = vmatpush1.bf16.msra.mxu0 0
    %818 = vmatprep.subr.bf16.mxu0 0
    %819 = vmatpush1.bf16.msra.mxu0 0
    %820 = vmatprep.subr.bf16.mxu0 0
    %821 = vmatpush1.bf16.msra.mxu0 0
    %822 = vmatprep.subr.bf16.mxu0 0
    %823 = vmatpush1.bf16.msra.mxu0 0
    %824 = vmatprep.subr.bf16.mxu0 0
    %825 = vmatpush1.bf16.msra.mxu0 0
    %826 = vmatprep.subr.bf16.mxu0 0
    %827 = vmatpush1.bf16.msra.mxu0 0
    %828 = vmatprep.subr.bf16.mxu0 0
    %829 = vmatpush1.bf16.msra.mxu0 0
    %830 = vmatprep.subr.bf16.mxu0 0
    %831 = vmatpush1.bf16.msra.mxu0 0
    %832 = vmatprep.subr.bf16.mxu0 0
    %833 = vmatpush1.bf16.msra.mxu0 0
    %834 = vmatprep.subr.bf16.mxu0 0
    %835 = vmatpush1.bf16.msra.mxu0 0
    %836 = vmatprep.subr.bf16.mxu0 0
    %837 = vmatpush1.bf16.msra.mxu0 0
    %838 = vmatprep.mubr.bf16.mxu0 0
    %839 = vmatmul.mubr.bf16.gmra.mrb[0].mxu0 %v801
    %v840 = vpop.f32.mrb[0].mxu0
    %v841 = vadd.f32 %v795, %v840
    %v842 = vpop.f32.mrb[0].mxu0
    %v843 = vpop.f32.mrb[0].mxu0
    %v844 = vpop.f32.mrb[0].mxu0
    %845 = vdwg.mxu0
    %846 = vrot.lane.b32.xlu0 %v138, 48
    %v847 = vpop.permute.xlu0 %846
    %v849 = vsel %vm142, %v645, 0
    %v852 = vsel %vm658, %v847, 0
    %854 = vmatprep.subr.bf16.mxu0 0
    %855 = vmatpush1.bf16.msra.mxu0 %v852
    %856 = vmatprep.subr.bf16.mxu0 0
    %857 = vmatpush1.bf16.msra.mxu0 0
    %858 = vmatprep.subr.bf16.mxu0 0
    %859 = vmatpush1.bf16.msra.mxu0 0
    %860 = vmatprep.subr.bf16.mxu0 0
    %861 = vmatpush1.bf16.msra.mxu0 0
    %862 = vmatprep.subr.bf16.mxu0 0
    %863 = vmatpush1.bf16.msra.mxu0 0
    %864 = vmatprep.subr.bf16.mxu0 0
    %865 = vmatpush1.bf16.msra.mxu0 0
    %866 = vmatprep.subr.bf16.mxu0 0
    %867 = vmatpush1.bf16.msra.mxu0 0
    %868 = vmatprep.subr.bf16.mxu0 0
    %869 = vmatpush1.bf16.msra.mxu0 0
    %870 = vmatprep.subr.bf16.mxu0 0
    %871 = vmatpush1.bf16.msra.mxu0 0
    %872 = vmatprep.subr.bf16.mxu0 0
    %873 = vmatpush1.bf16.msra.mxu0 0
    %874 = vmatprep.subr.bf16.mxu0 0
    %875 = vmatpush1.bf16.msra.mxu0 0
    %876 = vmatprep.subr.bf16.mxu0 0
    %877 = vmatpush1.bf16.msra.mxu0 0
    %878 = vmatprep.subr.bf16.mxu0 0
    %879 = vmatpush1.bf16.msra.mxu0 0
    %880 = vmatprep.subr.bf16.mxu0 0
    %881 = vmatpush1.bf16.msra.mxu0 0
    %882 = vmatprep.subr.bf16.mxu0 0
    %883 = vmatpush1.bf16.msra.mxu0 0
    %884 = vmatprep.subr.bf16.mxu0 0
    %885 = vmatpush1.bf16.msra.mxu0 0
    %886 = vmatprep.mubr.bf16.mxu0 0
    %887 = vmatmul.mubr.bf16.gmra.mrb[0].mxu0 %v849
    %v888 = vpop.f32.mrb[0].mxu0
    %v889 = vadd.f32 0.0, %v888
    %v890 = vpop.f32.mrb[0].mxu0
    %v891 = vpop.f32.mrb[0].mxu0
    %v892 = vpop.f32.mrb[0].mxu0
    %893 = vdwg.mxu0
    %v894 = vpack.c.bf16 %v889, %v889
    %v896 = vsel %vm142, %v894, 0
    %v899 = vsel %vm658, %v650, 0
    %901 = vmatprep.subr.bf16.mxu0 0
    %902 = vmatpush1.bf16.msra.mxu0 %v899
    %903 = vmatprep.subr.bf16.mxu0 0
    %904 = vmatpush1.bf16.msra.mxu0 0
    %905 = vmatprep.subr.bf16.mxu0 0
    %906 = vmatpush1.bf16.msra.mxu0 0
    %907 = vmatprep.subr.bf16.mxu0 0
    %908 = vmatpush1.bf16.msra.mxu0 0
    %909 = vmatprep.subr.bf16.mxu0 0
    %910 = vmatpush1.bf16.msra.mxu0 0
    %911 = vmatprep.subr.bf16.mxu0 0
    %912 = vmatpush1.bf16.msra.mxu0 0
    %913 = vmatprep.subr.bf16.mxu0 0
    %914 = vmatpush1.bf16.msra.mxu0 0
    %915 = vmatprep.subr.bf16.mxu0 0
    %916 = vmatpush1.bf16.msra.mxu0 0
    %917 = vmatprep.subr.bf16.mxu0 0
    %918 = vmatpush1.bf16.msra.mxu0 0
    %919 = vmatprep.subr.bf16.mxu0 0
    %920 = vmatpush1.bf16.msra.mxu0 0
    %921 = vmatprep.subr.bf16.mxu0 0
    %922 = vmatpush1.bf16.msra.mxu0 0
    %923 = vmatprep.subr.bf16.mxu0 0
    %924 = vmatpush1.bf16.msra.mxu0 0
    %925 = vmatprep.subr.bf16.mxu0 0
    %926 = vmatpush1.bf16.msra.mxu0 0
    %927 = vmatprep.subr.bf16.mxu0 0
    %928 = vmatpush1.bf16.msra.mxu0 0
    %929 = vmatprep.subr.bf16.mxu0 0
    %930 = vmatpush1.bf16.msra.mxu0 0
    %931 = vmatprep.subr.bf16.mxu0 0
    %932 = vmatpush1.bf16.msra.mxu0 0
    %933 = vmatprep.mubr.bf16.mxu0 0
    %934 = vmatmul.mubr.bf16.gmra.mrb[0].mxu0 %v896
    %v935 = vpop.f32.mrb[0].mxu0
    %v936 = vadd.f32 0.0, %v935
    %v937 = vpop.f32.mrb[0].mxu0
    %v938 = vpop.f32.mrb[0].mxu0
    %v939 = vpop.f32.mrb[0].mxu0
    %940 = vdwg.mxu0
    %v941 = vadd.f32 %v841, %v936
    %v943 = vrot.slane %v645, 4
    %944 = vrot.lane.b32.xlu0 %v138, 40
    %v945 = vpop.permute.xlu0 %944
    %v947 = vsel %vm142, %v943, 0
    %v950 = vsel %vm658, %v945, 0
    %952 = vmatprep.subr.bf16.mxu0 0
    %953 = vmatpush1.bf16.msra.mxu0 %v950
    %954 = vmatprep.subr.bf16.mxu0 0
    %955 = vmatpush1.bf16.msra.mxu0 0
    %956 = vmatprep.subr.bf16.mxu0 0
    %957 = vmatpush1.bf16.msra.mxu0 0
    %958 = vmatprep.subr.bf16.mxu0 0
    %959 = vmatpush1.bf16.msra.mxu0 0
    %960 = vmatprep.subr.bf16.mxu0 0
    %961 = vmatpush1.bf16.msra.mxu0 0
    %962 = vmatprep.subr.bf16.mxu0 0
    %963 = vmatpush1.bf16.msra.mxu0 0
    %964 = vmatprep.subr.bf16.mxu0 0
    %965 = vmatpush1.bf16.msra.mxu0 0
    %966 = vmatprep.subr.bf16.mxu0 0
    %967 = vmatpush1.bf16.msra.mxu0 0
    %968 = vmatprep.subr.bf16.mxu0 0
    %969 = vmatpush1.bf16.msra.mxu0 0
    %970 = vmatprep.subr.bf16.mxu0 0
    %971 = vmatpush1.bf16.msra.mxu0 0
    %972 = vmatprep.subr.bf16.mxu0 0
    %973 = vmatpush1.bf16.msra.mxu0 0
    %974 = vmatprep.subr.bf16.mxu0 0
    %975 = vmatpush1.bf16.msra.mxu0 0
    %976 = vmatprep.subr.bf16.mxu0 0
    %977 = vmatpush1.bf16.msra.mxu0 0
    %978 = vmatprep.subr.bf16.mxu0 0
    %979 = vmatpush1.bf16.msra.mxu0 0
    %980 = vmatprep.subr.bf16.mxu0 0
    %981 = vmatpush1.bf16.msra.mxu0 0
    %982 = vmatprep.subr.bf16.mxu0 0
    %983 = vmatpush1.bf16.msra.mxu0 0
    %984 = vmatprep.mubr.bf16.mxu0 0
    %985 = vmatmul.mubr.bf16.gmra.mrb[0].mxu0 %v947
    %v986 = vpop.f32.mrb[0].mxu0
    %v987 = vadd.f32 0.0, %v986
    %v988 = vpop.f32.mrb[0].mxu0
    %v989 = vpop.f32.mrb[0].mxu0
    %v990 = vpop.f32.mrb[0].mxu0
    %991 = vdwg.mxu0
    %v992 = vpack.c.bf16 %v987, %v987
    %v994 = vsel %vm142, %v992, 0
    %v997 = vsel %vm658, %v651, 0
    %999 = vmatprep.subr.bf16.mxu0 0
    %1000 = vmatpush1.bf16.msra.mxu0 %v997
    %1001 = vmatprep.subr.bf16.mxu0 0
    %1002 = vmatpush1.bf16.msra.mxu0 0
    %1003 = vmatprep.subr.bf16.mxu0 0
    %1004 = vmatpush1.bf16.msra.mxu0 0
    %1005 = vmatprep.subr.bf16.mxu0 0
    %1006 = vmatpush1.bf16.msra.mxu0 0
    %1007 = vmatprep.subr.bf16.mxu0 0
    %1008 = vmatpush1.bf16.msra.mxu0 0
    %1009 = vmatprep.subr.bf16.mxu0 0
    %1010 = vmatpush1.bf16.msra.mxu0 0
    %1011 = vmatprep.subr.bf16.mxu0 0
    %1012 = vmatpush1.bf16.msra.mxu0 0
    %1013 = vmatprep.subr.bf16.mxu0 0
    %1014 = vmatpush1.bf16.msra.mxu0 0
    %1015 = vmatprep.subr.bf16.mxu0 0
    %1016 = vmatpush1.bf16.msra.mxu0 0
    %1017 = vmatprep.subr.bf16.mxu0 0
    %1018 = vmatpush1.bf16.msra.mxu0 0
    %1019 = vmatprep.subr.bf16.mxu0 0
    %1020 = vmatpush1.bf16.msra.mxu0 0
    %1021 = vmatprep.subr.bf16.mxu0 0
    %1022 = vmatpush1.bf16.msra.mxu0 0
    %1023 = vmatprep.subr.bf16.mxu0 0
    %1024 = vmatpush1.bf16.msra.mxu0 0
    %1025 = vmatprep.subr.bf16.mxu0 0
    %1026 = vmatpush1.bf16.msra.mxu0 0
    %1027 = vmatprep.subr.bf16.mxu0 0
    %1028 = vmatpush1.bf16.msra.mxu0 0
    %1029 = vmatprep.subr.bf16.mxu0 0
    %1030 = vmatpush1.bf16.msra.mxu0 0
    %1031 = vmatprep.mubr.bf16.mxu0 0
    %1032 = vmatmul.mubr.bf16.gmra.mrb[0].mxu0 %v994
    %v1033 = vpop.f32.mrb[0].mxu0
    %v1034 = vadd.f32 0.0, %v1033
    %v1035 = vpop.f32.mrb[0].mxu0
    %v1036 = vpop.f32.mrb[0].mxu0
    %v1037 = vpop.f32.mrb[0].mxu0
    %1038 = vdwg.mxu0
    %v1039 = vadd.f32 %v941, %v1034
    %v1040 = vld [vmem:[%s5] sm:$0x1]
    %v1042 = vlaneseq
    %v1043 = vshrl.u32 %v1042, 7
    %v1044 = vsub.s32 0, %v1043
    %v1045 = vrot.slane %v1040, %v1044
    %v1047 = vadd.f32 %v1039, %v1045
    %v1048 = vrot.slane %v138, 4
    %1049 = vrot.lane.b32.xlu0 %v1048, 64
    %v1050 = vpop.permute.xlu0 %1049
    %v1052 = vsel %vm142, %v646, 0
    %v1055 = vsel %vm658, %v1050, 0
    %1057 = vmatprep.subr.bf16.mxu0 0
    %1058 = vmatpush1.bf16.msra.mxu0 %v1055
    %1059 = vmatprep.subr.bf16.mxu0 0
    %1060 = vmatpush1.bf16.msra.mxu0 0
    %1061 = vmatprep.subr.bf16.mxu0 0
    %1062 = vmatpush1.bf16.msra.mxu0 0
    %1063 = vmatprep.subr.bf16.mxu0 0
    %1064 = vmatpush1.bf16.msra.mxu0 0
    %1065 = vmatprep.subr.bf16.mxu0 0
    %1066 = vmatpush1.bf16.msra.mxu0 0
    %1067 = vmatprep.subr.bf16.mxu0 0
    %1068 = vmatpush1.bf16.msra.mxu0 0
    %1069 = vmatprep.subr.bf16.mxu0 0
    %1070 = vmatpush1.bf16.msra.mxu0 0
    %1071 = vmatprep.subr.bf16.mxu0 0
    %1072 = vmatpush1.bf16.msra.mxu0 0
    %1073 = vmatprep.subr.bf16.mxu0 0
    %1074 = vmatpush1.bf16.msra.mxu0 0
    %1075 = vmatprep.subr.bf16.mxu0 0
    %1076 = vmatpush1.bf16.msra.mxu0 0
    %1077 = vmatprep.subr.bf16.mxu0 0
    %1078 = vmatpush1.bf16.msra.mxu0 0
    %1079 = vmatprep.subr.bf16.mxu0 0
    %1080 = vmatpush1.bf16.msra.mxu0 0
    %1081 = vmatprep.subr.bf16.mxu0 0
    %1082 = vmatpush1.bf16.msra.mxu0 0
    %1083 = vmatprep.subr.bf16.mxu0 0
    %1084 = vmatpush1.bf16.msra.mxu0 0
    %1085 = vmatprep.subr.bf16.mxu0 0
    %1086 = vmatpush1.bf16.msra.mxu0 0
    %1087 = vmatprep.subr.bf16.mxu0 0
    %1088 = vmatpush1.bf16.msra.mxu0 0
    %1089 = vmatprep.mubr.bf16.mxu0 0
    %1090 = vmatmul.mubr.bf16.gmra.mrb[0].mxu0 %v1052
    %v1091 = vpop.f32.mrb[0].mxu0
    %v1092 = vadd.f32 0.0, %v1091
    %v1093 = vpop.f32.mrb[0].mxu0
    %v1094 = vpop.f32.mrb[0].mxu0
    %v1095 = vpop.f32.mrb[0].mxu0
    %1096 = vdwg.mxu0
    %v1097 = vpack.c.bf16 %v1092, %v1092
    %v1099 = vrot.slane %v646, 4
    %1100 = vrot.lane.b32.xlu0 %v1048, 56
    %v1101 = vpop.permute.xlu0 %1100
    %v1103 = vsel %vm142, %v1099, 0
    %v1106 = vsel %vm658, %v1101, 0
    %1108 = vmatprep.subr.bf16.mxu0 0
    %1109 = vmatpush1.bf16.msra.mxu0 %v1106
    %1110 = vmatprep.subr.bf16.mxu0 0
    %1111 = vmatpush1.bf16.msra.mxu0 0
    %1112 = vmatprep.subr.bf16.mxu0 0
    %1113 = vmatpush1.bf16.msra.mxu0 0
    %1114 = vmatprep.subr.bf16.mxu0 0
    %1115 = vmatpush1.bf16.msra.mxu0 0
    %1116 = vmatprep.subr.bf16.mxu0 0
    %1117 = vmatpush1.bf16.msra.mxu0 0
    %1118 = vmatprep.subr.bf16.mxu0 0
    %1119 = vmatpush1.bf16.msra.mxu0 0
    %1120 = vmatprep.subr.bf16.mxu0 0
    %1121 = vmatpush1.bf16.msra.mxu0 0
    %1122 = vmatprep.subr.bf16.mxu0 0
    %1123 = vmatpush1.bf16.msra.mxu0 0
    %1124 = vmatprep.subr.bf16.mxu0 0
    %1125 = vmatpush1.bf16.msra.mxu0 0
    %1126 = vmatprep.subr.bf16.mxu0 0
    %1127 = vmatpush1.bf16.msra.mxu0 0
    %1128 = vmatprep.subr.bf16.mxu0 0
    %1129 = vmatpush1.bf16.msra.mxu0 0
    %1130 = vmatprep.subr.bf16.mxu0 0
    %1131 = vmatpush1.bf16.msra.mxu0 0
    %1132 = vmatprep.subr.bf16.mxu0 0
    %1133 = vmatpush1.bf16.msra.mxu0 0
    %1134 = vmatprep.subr.bf16.mxu0 0
    %1135 = vmatpush1.bf16.msra.mxu0 0
    %1136 = vmatprep.subr.bf16.mxu0 0
    %1137 = vmatpush1.bf16.msra.mxu0 0
    %1138 = vmatprep.subr.bf16.mxu0 0
    %1139 = vmatpush1.bf16.msra.mxu0 0
    %1140 = vmatprep.mubr.bf16.mxu0 0
    %1141 = vmatmul.mubr.bf16.gmra.mrb[0].mxu0 %v1103
    %v1142 = vpop.f32.mrb[0].mxu0
    %v1143 = vadd.f32 0.0, %v1142
    %v1144 = vpop.f32.mrb[0].mxu0
    %v1145 = vpop.f32.mrb[0].mxu0
    %v1146 = vpop.f32.mrb[0].mxu0
    %1147 = vdwg.mxu0
    %v1148 = vpack.c.bf16 %v1143, %v1143
    %v1150 = vsel %vm142, %v1148, 0
    %1152 = vmatprep.subr.bf16.mxu0 0
    %1153 = vmatpush1.bf16.msra.mxu0 %v758
    %1154 = vmatprep.subr.bf16.mxu0 0
    %1155 = vmatpush1.bf16.msra.mxu0 0
    %1156 = vmatprep.subr.bf16.mxu0 0
    %1157 = vmatpush1.bf16.msra.mxu0 0
    %1158 = vmatprep.subr.bf16.mxu0 0
    %1159 = vmatpush1.bf16.msra.mxu0 0
    %1160 = vmatprep.subr.bf16.mxu0 0
    %1161 = vmatpush1.bf16.msra.mxu0 0
    %1162 = vmatprep.subr.bf16.mxu0 0
    %1163 = vmatpush1.bf16.msra.mxu0 0
    %1164 = vmatprep.subr.bf16.mxu0 0
    %1165 = vmatpush1.bf16.msra.mxu0 0
    %1166 = vmatprep.subr.bf16.mxu0 0
    %1167 = vmatpush1.bf16.msra.mxu0 0
    %1168 = vmatprep.subr.bf16.mxu0 0
    %1169 = vmatpush1.bf16.msra.mxu0 0
    %1170 = vmatprep.subr.bf16.mxu0 0
    %1171 = vmatpush1.bf16.msra.mxu0 0
    %1172 = vmatprep.subr.bf16.mxu0 0
    %1173 = vmatpush1.bf16.msra.mxu0 0
    %1174 = vmatprep.subr.bf16.mxu0 0
    %1175 = vmatpush1.bf16.msra.mxu0 0
    %1176 = vmatprep.subr.bf16.mxu0 0
    %1177 = vmatpush1.bf16.msra.mxu0 0
    %1178 = vmatprep.subr.bf16.mxu0 0
    %1179 = vmatpush1.bf16.msra.mxu0 0
    %1180 = vmatprep.subr.bf16.mxu0 0
    %1181 = vmatpush1.bf16.msra.mxu0 0
    %1182 = vmatprep.subr.bf16.mxu0 0
    %1183 = vmatpush1.bf16.msra.mxu0 0
    %1184 = vmatprep.mubr.bf16.mxu0 0
    %1185 = vmatmul.mubr.bf16.gmra.mrb[0].mxu0 %v1150
    %v1186 = vpop.f32.mrb[0].mxu0
    %v1187 = vadd.f32 0.0, %v1186
    %v1188 = vpop.f32.mrb[0].mxu0
    %v1189 = vpop.f32.mrb[0].mxu0
    %v1190 = vpop.f32.mrb[0].mxu0
    %1191 = vdwg.mxu0
    %v1193 = vsel %vm142, %v1097, 0
    %1195 = vmatprep.subr.bf16.mxu0 0
    %1196 = vmatpush1.bf16.msra.mxu0 %v804
    %1197 = vmatprep.subr.bf16.mxu0 0
    %1198 = vmatpush1.bf16.msra.mxu0 0
    %1199 = vmatprep.subr.bf16.mxu0 0
    %1200 = vmatpush1.bf16.msra.mxu0 0
    %1201 = vmatprep.subr.bf16.mxu0 0
    %1202 = vmatpush1.bf16.msra.mxu0 0
    %1203 = vmatprep.subr.bf16.mxu0 0
    %1204 = vmatpush1.bf16.msra.mxu0 0
    %1205 = vmatprep.subr.bf16.mxu0 0
    %1206 = vmatpush1.bf16.msra.mxu0 0
    %1207 = vmatprep.subr.bf16.mxu0 0
    %1208 = vmatpush1.bf16.msra.mxu0 0
    %1209 = vmatprep.subr.bf16.mxu0 0
    %1210 = vmatpush1.bf16.msra.mxu0 0
    %1211 = vmatprep.subr.bf16.mxu0 0
    %1212 = vmatpush1.bf16.msra.mxu0 0
    %1213 = vmatprep.subr.bf16.mxu0 0
    %1214 = vmatpush1.bf16.msra.mxu0 0
    %1215 = vmatprep.subr.bf16.mxu0 0
    %1216 = vmatpush1.bf16.msra.mxu0 0
    %1217 = vmatprep.subr.bf16.mxu0 0
    %1218 = vmatpush1.bf16.msra.mxu0 0
    %1219 = vmatprep.subr.bf16.mxu0 0
    %1220 = vmatpush1.bf16.msra.mxu0 0
    %1221 = vmatprep.subr.bf16.mxu0 0
    %1222 = vmatpush1.bf16.msra.mxu0 0
    %1223 = vmatprep.subr.bf16.mxu0 0
    %1224 = vmatpush1.bf16.msra.mxu0 0
    %1225 = vmatprep.subr.bf16.mxu0 0
    %1226 = vmatpush1.bf16.msra.mxu0 0
    %1227 = vmatprep.mubr.bf16.mxu0 0
    %1228 = vmatmul.mubr.bf16.gmra.mrb[0].mxu0 %v1193
    %v1229 = vpop.f32.mrb[0].mxu0
    %v1230 = vadd.f32 %v1187, %v1229
    %v1231 = vpop.f32.mrb[0].mxu0
    %v1232 = vpop.f32.mrb[0].mxu0
    %v1233 = vpop.f32.mrb[0].mxu0
    %1234 = vdwg.mxu0
    %1235 = vrot.lane.b32.xlu0 %v1048, 48
    %v1236 = vpop.permute.xlu0 %1235
    %v1238 = vsel %vm142, %v647, 0
    %v1241 = vsel %vm658, %v1236, 0
    %1243 = vmatprep.subr.bf16.mxu0 0
    %1244 = vmatpush1.bf16.msra.mxu0 %v1241
    %1245 = vmatprep.subr.bf16.mxu0 0
    %1246 = vmatpush1.bf16.msra.mxu0 0
    %1247 = vmatprep.subr.bf16.mxu0 0
    %1248 = vmatpush1.bf16.msra.mxu0 0
    %1249 = vmatprep.subr.bf16.mxu0 0
    %1250 = vmatpush1.bf16.msra.mxu0 0
    %1251 = vmatprep.subr.bf16.mxu0 0
    %1252 = vmatpush1.bf16.msra.mxu0 0
    %1253 = vmatprep.subr.bf16.mxu0 0
    %1254 = vmatpush1.bf16.msra.mxu0 0
    %1255 = vmatprep.subr.bf16.mxu0 0
    %1256 = vmatpush1.bf16.msra.mxu0 0
    %1257 = vmatprep.subr.bf16.mxu0 0
    %1258 = vmatpush1.bf16.msra.mxu0 0
    %1259 = vmatprep.subr.bf16.mxu0 0
    %1260 = vmatpush1.bf16.msra.mxu0 0
    %1261 = vmatprep.subr.bf16.mxu0 0
    %1262 = vmatpush1.bf16.msra.mxu0 0
    %1263 = vmatprep.subr.bf16.mxu0 0
    %1264 = vmatpush1.bf16.msra.mxu0 0
    %1265 = vmatprep.subr.bf16.mxu0 0
    %1266 = vmatpush1.bf16.msra.mxu0 0
    %1267 = vmatprep.subr.bf16.mxu0 0
    %1268 = vmatpush1.bf16.msra.mxu0 0
    %1269 = vmatprep.subr.bf16.mxu0 0
    %1270 = vmatpush1.bf16.msra.mxu0 0
    %1271 = vmatprep.subr.bf16.mxu0 0
    %1272 = vmatpush1.bf16.msra.mxu0 0
    %1273 = vmatprep.subr.bf16.mxu0 0
    %1274 = vmatpush1.bf16.msra.mxu0 0
    %1275 = vmatprep.mubr.bf16.mxu0 0
    %1276 = vmatmul.mubr.bf16.gmra.mrb[0].mxu0 %v1238
    %v1277 = vpop.f32.mrb[0].mxu0
    %v1278 = vadd.f32 0.0, %v1277
    %v1279 = vpop.f32.mrb[0].mxu0
    %v1280 = vpop.f32.mrb[0].mxu0
    %v1281 = vpop.f32.mrb[0].mxu0
    %1282 = vdwg.mxu0
    %v1283 = vpack.c.bf16 %v1278, %v1278
    %v1285 = vsel %vm142, %v1283, 0
    %1287 = vmatprep.subr.bf16.mxu0 0
    %1288 = vmatpush1.bf16.msra.mxu0 %v899
    %1289 = vmatprep.subr.bf16.mxu0 0
    %1290 = vmatpush1.bf16.msra.mxu0 0
    %1291 = vmatprep.subr.bf16.mxu0 0
    %1292 = vmatpush1.bf16.msra.mxu0 0
    %1293 = vmatprep.subr.bf16.mxu0 0
    %1294 = vmatpush1.bf16.msra.mxu0 0
    %1295 = vmatprep.subr.bf16.mxu0 0
    %1296 = vmatpush1.bf16.msra.mxu0 0
    %1297 = vmatprep.subr.bf16.mxu0 0
    %1298 = vmatpush1.bf16.msra.mxu0 0
    %1299 = vmatprep.subr.bf16.mxu0 0
    %1300 = vmatpush1.bf16.msra.mxu0 0
    %1301 = vmatprep.subr.bf16.mxu0 0
    %1302 = vmatpush1.bf16.msra.mxu0 0
    %1303 = vmatprep.subr.bf16.mxu0 0
    %1304 = vmatpush1.bf16.msra.mxu0 0
    %1305 = vmatprep.subr.bf16.mxu0 0
    %1306 = vmatpush1.bf16.msra.mxu0 0
    %1307 = vmatprep.subr.bf16.mxu0 0
    %1308 = vmatpush1.bf16.msra.mxu0 0
    %1309 = vmatprep.subr.bf16.mxu0 0
    %1310 = vmatpush1.bf16.msra.mxu0 0
    %1311 = vmatprep.subr.bf16.mxu0 0
    %1312 = vmatpush1.bf16.msra.mxu0 0
    %1313 = vmatprep.subr.bf16.mxu0 0
    %1314 = vmatpush1.bf16.msra.mxu0 0
    %1315 = vmatprep.subr.bf16.mxu0 0
    %1316 = vmatpush1.bf16.msra.mxu0 0
    %1317 = vmatprep.subr.bf16.mxu0 0
    %1318 = vmatpush1.bf16.msra.mxu0 0
    %1319 = vmatprep.mubr.bf16.mxu0 0
    %1320 = vmatmul.mubr.bf16.gmra.mrb[0].mxu0 %v1285
    %v1321 = vpop.f32.mrb[0].mxu0
    %v1322 = vadd.f32 0.0, %v1321
    %v1323 = vpop.f32.mrb[0].mxu0
    %v1324 = vpop.f32.mrb[0].mxu0
    %v1325 = vpop.f32.mrb[0].mxu0
    %1326 = vdwg.mxu0
    %v1327 = vadd.f32 %v1230, %v1322
    %v1329 = vrot.slane %v647, 4
    %1330 = vrot.lane.b32.xlu0 %v1048, 40
    %v1331 = vpop.permute.xlu0 %1330
    %v1333 = vsel %vm142, %v1329, 0
    %v1336 = vsel %vm658, %v1331, 0
    %1338 = vmatprep.subr.bf16.mxu0 0
    %1339 = vmatpush1.bf16.msra.mxu0 %v1336
    %1340 = vmatprep.subr.bf16.mxu0 0
    %1341 = vmatpush1.bf16.msra.mxu0 0
    %1342 = vmatprep.subr.bf16.mxu0 0
    %1343 = vmatpush1.bf16.msra.mxu0 0
    %1344 = vmatprep.subr.bf16.mxu0 0
    %1345 = vmatpush1.bf16.msra.mxu0 0
    %1346 = vmatprep.subr.bf16.mxu0 0
    %1347 = vmatpush1.bf16.msra.mxu0 0
    %1348 = vmatprep.subr.bf16.mxu0 0
    %1349 = vmatpush1.bf16.msra.mxu0 0
    %1350 = vmatprep.subr.bf16.mxu0 0
    %1351 = vmatpush1.bf16.msra.mxu0 0
    %1352 = vmatprep.subr.bf16.mxu0 0
    %1353 = vmatpush1.bf16.msra.mxu0 0
    %1354 = vmatprep.subr.bf16.mxu0 0
    %1355 = vmatpush1.bf16.msra.mxu0 0
    %1356 = vmatprep.subr.bf16.mxu0 0
    %1357 = vmatpush1.bf16.msra.mxu0 0
    %1358 = vmatprep.subr.bf16.mxu0 0
    %1359 = vmatpush1.bf16.msra.mxu0 0
    %1360 = vmatprep.subr.bf16.mxu0 0
    %1361 = vmatpush1.bf16.msra.mxu0 0
    %1362 = vmatprep.subr.bf16.mxu0 0
    %1363 = vmatpush1.bf16.msra.mxu0 0
    %1364 = vmatprep.subr.bf16.mxu0 0
    %1365 = vmatpush1.bf16.msra.mxu0 0
    %1366 = vmatprep.subr.bf16.mxu0 0
    %1367 = vmatpush1.bf16.msra.mxu0 0
    %1368 = vmatprep.subr.bf16.mxu0 0
    %1369 = vmatpush1.bf16.msra.mxu0 0
    %1370 = vmatprep.mubr.bf16.mxu0 0
    %1371 = vmatmul.mubr.bf16.gmra.mrb[0].mxu0 %v1333
    %v1372 = vpop.f32.mrb[0].mxu0
    %v1373 = vadd.f32 0.0, %v1372
    %v1374 = vpop.f32.mrb[0].mxu0
    %v1375 = vpop.f32.mrb[0].mxu0
    %v1376 = vpop.f32.mrb[0].mxu0
    %1377 = vdwg.mxu0
    %v1378 = vpack.c.bf16 %v1373, %v1373
    %v1380 = vsel %vm142, %v1378, 0
    %1382 = vmatprep.subr.bf16.mxu0 0
    %1383 = vmatpush1.bf16.msra.mxu0 %v997
    %1384 = vmatprep.subr.bf16.mxu0 0
    %1385 = vmatpush1.bf16.msra.mxu0 0
    %1386 = vmatprep.subr.bf16.mxu0 0
    %1387 = vmatpush1.bf16.msra.mxu0 0
    %1388 = vmatprep.subr.bf16.mxu0 0
    %1389 = vmatpush1.bf16.msra.mxu0 0
    %1390 = vmatprep.subr.bf16.mxu0 0
    %1391 = vmatpush1.bf16.msra.mxu0 0
    %1392 = vmatprep.subr.bf16.mxu0 0
    %1393 = vmatpush1.bf16.msra.mxu0 0
    %1394 = vmatprep.subr.bf16.mxu0 0
    %1395 = vmatpush1.bf16.msra.mxu0 0
    %1396 = vmatprep.subr.bf16.mxu0 0
    %1397 = vmatpush1.bf16.msra.mxu0 0
    %1398 = vmatprep.subr.bf16.mxu0 0
    %1399 = vmatpush1.bf16.msra.mxu0 0
    %1400 = vmatprep.subr.bf16.mxu0 0
    %1401 = vmatpush1.bf16.msra.mxu0 0
    %1402 = vmatprep.subr.bf16.mxu0 0
    %1403 = vmatpush1.bf16.msra.mxu0 0
    %1404 = vmatprep.subr.bf16.mxu0 0
    %1405 = vmatpush1.bf16.msra.mxu0 0
    %1406 = vmatprep.subr.bf16.mxu0 0
    %1407 = vmatpush1.bf16.msra.mxu0 0
    %1408 = vmatprep.subr.bf16.mxu0 0
    %1409 = vmatpush1.bf16.msra.mxu0 0
    %1410 = vmatprep.subr.bf16.mxu0 0
    %1411 = vmatpush1.bf16.msra.mxu0 0
    %1412 = vmatprep.subr.bf16.mxu0 0
    %1413 = vmatpush1.bf16.msra.mxu0 0
    %1414 = vmatprep.mubr.bf16.mxu0 0
    %1415 = vmatmul.mubr.bf16.gmra.mrb[0].mxu0 %v1380
    %v1416 = vpop.f32.mrb[0].mxu0
    %v1417 = vadd.f32 0.0, %v1416
    %v1418 = vpop.f32.mrb[0].mxu0
    %v1419 = vpop.f32.mrb[0].mxu0
    %v1420 = vpop.f32.mrb[0].mxu0
    %1421 = vdwg.mxu0
    %v1422 = vadd.f32 %v1327, %v1417
    %v1423 = vadd.f32 %v1422, %v1045
    %1424 = vst.msk [vmem:[#allocation2] sm:$0xff] %vm69, %v1047
    %1425 = vst.msk [vmem:[#allocation2 + $0x8] sm:$0xff] %vm69, %v1423
    // Predicated region
    $region26: #{tpu_custom_call.1} parent=1 // pred_check
      _
    $region27: #{tpu_custom_call.1} parent=1 // pred_check_branch
      %1427 = sbr.rel (0) target = $region29
    $region28: #{tpu_custom_call.1} parent=1 // pred_region
      %s1429 = ssub.s32 256, 256
      %1430 = vsyncadd [#allocation3], %s1429
      %s1431 = sshll.u32 [#allocation2], 4
      %s1432 = int_to_ptr.vmem [resolvable:$true] %s1431
      %1437 = dma.vmem_to_hbm [thread:$0]  %s1432, 256, %s6, [#allocation3], 128, 128, 8
    $region29: #{tpu_custom_call.1} parent=1 // pred_fallthru
      _
    // Predicated region
    $region30: #{tpu_custom_call.1} parent=1 // pred_check
      _
    $region31: #{tpu_custom_call.1} parent=1 // pred_check_branch
      %1439 = sbr.rel (0) target = $region33
    $region32: #{tpu_custom_call.1} parent=1 // pred_region
      %1440 = dma.done [#allocation3], 256
    $region33: #{tpu_custom_call.1} parent=1 // pred_fallthru
      _
    %1441 = vsyncpa [#allocation3], 1

</llo_original>
